<compile_context>
chip_gen: v7x
topology: tpu7x:2x2x1
jax: 0.10.0
libtpu: 0.0.40
codegen_flags: <defaults>
</compile_context>

<pallas_src>
import math

import jax
import jax.numpy as jnp
import numpy as np
from jax.experimental import pallas as pl
from jax.experimental.pallas import tpu as pltpu


# ----------------------------- config ("args") -----------------------------
class Args:
    compressor_hidden_size = 32
    num_attention_heads = 4
    pw_window_sizes = (2, 4)
    num_eval_documents = 2


RMS_EPS = 1e-5
NEG_MIN = float(jnp.finfo(jnp.float32).min)


# ------------------------------ fused kernel ------------------------------
def fused_pooling_kernel(que_ref, qmask_ref, doc_ref, dmask_ref, wint_ref, padv_ref,
                         winv_ref, wq_ref, wk_ref, gd_ref, hmat_ref, qsel_ref, dsel_ref,
                         out_ref, omask_ref):
    f32 = jnp.float32
    contract = (((1,), (1,)), ((), ()))              # y = x @ W.T

    # ----- query: masked mean -> RMSNorm -> Q projection (2-D, batch folded in M) -----
    # wq_ref already carries the que RMSNorm gain and 1/sqrt(head_dim) folded in.
    que = que_ref[0]                                 # (cb*q_len, hidden)
    qm = qmask_ref[0]                                # (cb*q_len, 1)
    qsel = qsel_ref[...]                             # (cb, cb*q_len) 0/1 sample membership
    que_sum = jnp.dot(qsel, que * qm, preferred_element_type=f32)   # (cb, hidden)
    denom = jnp.dot(qsel, qm, preferred_element_type=f32)           # (cb, 1)
    que_mean = que_sum / denom
    var_q = jnp.mean(que_mean * que_mean, axis=-1, keepdims=True)
    que_n = que_mean * jax.lax.rsqrt(var_q + RMS_EPS)
    q = jax.lax.dot_general(que_n, wq_ref[...], contract,
                            preferred_element_type=f32)             # (cb, hidden), pre-scaled

    # ----- doc: RMSNorm -> K projection, all cb*d_len rows in one MXU call -----
    doc = doc_ref[0]                                 # (cb*d_len, hidden)
    var_d = jnp.mean(doc * doc, axis=-1, keepdims=True)
    doc_n = doc * jax.lax.rsqrt(var_d + RMS_EPS) * gd_ref[...]
    k = jax.lax.dot_general(doc_n, wk_ref[...], contract,
                            preferred_element_type=f32)             # (cb*d_len, hidden)

    # ----- head-broadcast attention scores (lane-dense over hidden) -----
    q_rows = jnp.dot(dsel_ref[...], q, preferred_element_type=f32)  # (cb*d_len, hidden)
    # hmat[i, j] = 1 iff i, j in the same head  ->  per-head q.k summed and broadcast
    scores = jnp.dot(q_rows * k, hmat_ref[...],
                     preferred_element_type=f32)                    # (cb*d_len, hidden)
    dm = dmask_ref[0]                                # (cb*d_len, 1)
    scores = jnp.where(dm > 0, scores, jnp.float32(NEG_MIN))

    # ----- per-window softmax pooling as 0/1 window-aggregation matmuls -----
    # softmax is shift-invariant: subtract one per-lane constant (>= every real score, >= 0)
    m = jnp.maximum(jnp.max(scores, axis=0, keepdims=True), 0.0)    # (1, hidden)
    e = jnp.exp(scores - m)                          # masked rows -> 0
    wint = wint_ref[0]                               # (cb*nw_max, cb*d_len) window membership
    num = jnp.dot(wint, e * doc_n, preferred_element_type=f32)      # (cb*nw_max, hidden)
    den = jnp.dot(wint, e, preferred_element_type=f32)              # (cb*nw_max, hidden)
    den = den + padv_ref[0] * jnp.exp(-m)            # left-pad zeros contribute exp(0 - m) each
    vsum = jnp.dot(wint, doc_n, preferred_element_type=f32)         # plain window value-sum
    # fully-masked (or unused) window -> uniform weights over the window (torch softmax of
    # all-equal NEG_MIN scores); unused rows have vsum == 0 so they stay zero.
    zero = den <= 0.0
    out_ref[0] = jnp.where(zero, vsum * winv_ref[0],
                           num / jnp.where(zero, 1.0, den))

    # pooled attention mask: any unmasked token inside the window
    msum = jnp.dot(wint, dm, preferred_element_type=f32)            # (cb*nw_max, 1)
    omask_ref[0] = (msum > 0).astype(f32)


# --------------------------------- forward ---------------------------------
def infer_pooling_forward(params, que_hidden, doc_hidden, enc_doc_mask, enc_que_mask, args):
    bsz, d_len, hidden = doc_hidden.shape
    q_len = que_hidden.shape[1]
    nh = args.num_attention_heads
    hd = hidden // nh
    wins = args.pw_window_sizes
    ned = args.num_eval_documents
    assert bsz % ned == 0
    cb = bsz // ned
    nw_max = math.ceil(d_len / min(wins))            # pooling_max_len
    f32 = jnp.float32
    scale = 1.0 / math.sqrt(hd)

    # ---- regroup batch so grid step g owns samples [g::ned] as contiguous rows ----
    que_g = (que_hidden.reshape(cb, ned, q_len, hidden).transpose(1, 0, 2, 3)
             .reshape(ned, cb * q_len, hidden).astype(f32))
    qm_g = (enc_que_mask.reshape(cb, ned, q_len).transpose(1, 0, 2)
            .reshape(ned, cb * q_len, 1).astype(f32))
    doc_g = (doc_hidden.reshape(cb, ned, d_len, hidden).transpose(1, 0, 2, 3)
             .reshape(ned, cb * d_len, hidden).astype(f32))
    dm_g = (enc_doc_mask.reshape(cb, ned, d_len).transpose(1, 0, 2)
            .reshape(ned, cb * d_len, 1).astype(f32))

    # ---- fold que RMSNorm gain + 1/sqrt(head_dim) into q_proj weight (trace-time) ----
    wq_folded = (params["wq"].astype(f32) * params["g_que"].astype(f32)[None, :]) * scale

    # ---- static helper matrices (tiny, baked at trace time) ----
    headmat = np.zeros((hidden, hidden), np.float32)          # same-head broadcast-sum
    for h in range(nh):
        headmat[h * hd:(h + 1) * hd, h * hd:(h + 1) * hd] = 1.0
    qsel = np.zeros((cb, cb * q_len), np.float32)             # query-row -> sample
    dsel = np.zeros((cb * d_len, cb), np.float32)             # doc-row  <- sample
    for b in range(cb):
        qsel[b, b * q_len:(b + 1) * q_len] = 1.0
        dsel[b * d_len:(b + 1) * d_len, b] = 1.0
    wint = np.zeros((ned, cb * nw_max, cb * d_len), np.float32)   # window membership
    padv = np.zeros((ned, cb * nw_max, 1), np.float32)            # left-pad counts per window
    winv = np.zeros((ned, 1, 1), np.float32)                      # 1 / window_size per group
    for g in range(ned):
        win = wins[g % len(wins)]
        pad = (-d_len) % win
        nw = (d_len + pad) // win
        off = nw_max - nw                        # right-align windows in the output slab
        winv[g, 0, 0] = 1.0 / win
        for b in range(cb):
            padv[g, b * nw_max + off, 0] = float(pad)
            for p in range(d_len):
                w = (p + pad) // win
                wint[g, b * nw_max + off + w, b * d_len + p] = 1.0

    pooled, pmask = pl.pallas_call(
        fused_pooling_kernel,
        out_shape=(jax.ShapeDtypeStruct((ned, cb * nw_max, hidden), f32),
                   jax.ShapeDtypeStruct((ned, cb * nw_max, 1), f32)),
        grid=(ned,),
        in_specs=[
            pl.BlockSpec((1, cb * q_len, hidden), lambda g: (g, 0, 0)),
            pl.BlockSpec((1, cb * q_len, 1), lambda g: (g, 0, 0)),
            pl.BlockSpec((1, cb * d_len, hidden), lambda g: (g, 0, 0)),
            pl.BlockSpec((1, cb * d_len, 1), lambda g: (g, 0, 0)),
            pl.BlockSpec((1, cb * nw_max, cb * d_len), lambda g: (g, 0, 0)),
            pl.BlockSpec((1, cb * nw_max, 1), lambda g: (g, 0, 0)),
            pl.BlockSpec((1, 1, 1), lambda g: (g, 0, 0)),
            pl.BlockSpec((hidden, hidden), lambda g: (0, 0)),
            pl.BlockSpec((hidden, hidden), lambda g: (0, 0)),
            pl.BlockSpec((1, hidden), lambda g: (0, 0)),
            pl.BlockSpec((hidden, hidden), lambda g: (0, 0)),
            pl.BlockSpec((cb, cb * q_len), lambda g: (0, 0)),
            pl.BlockSpec((cb * d_len, cb), lambda g: (0, 0)),
        ],
        out_specs=(
            pl.BlockSpec((1, cb * nw_max, hidden), lambda g: (g, 0, 0)),
            pl.BlockSpec((1, cb * nw_max, 1), lambda g: (g, 0, 0)),
        ),
        compiler_params=pltpu.CompilerParams(dimension_semantics=("parallel",)),
    )(que_g, qm_g, doc_g, dm_g,
      jnp.asarray(wint), jnp.asarray(padv), jnp.asarray(winv),
      wq_folded, params["wk"].astype(f32),
      params["g_doc"].reshape(1, hidden).astype(f32),
      jnp.asarray(headmat), jnp.asarray(qsel), jnp.asarray(dsel))

    # ---- ungroup: (ned, cb, ...) -> original batch order (b = g + ned*j) ----
    pooling_hidden = (pooled.reshape(ned, cb, nw_max, hidden).transpose(1, 0, 2, 3)
                      .reshape(bsz, nw_max, hidden))
    pooling_mask = (pmask.reshape(ned, cb, nw_max).transpose(1, 0, 2)
                    .reshape(bsz, nw_max).astype(enc_doc_mask.dtype))
    return pooling_hidden, pooling_mask


# --------------------------- pure-JAX reference ---------------------------
def reference_forward(params, que, doc, dmask, qmask, args):
    bsz, d_len, hidden = doc.shape
    nh = args.num_attention_heads
    hd = hidden // nh
    wins = args.pw_window_sizes
    ned = args.num_eval_documents

    def rms(x, g):
        var = jnp.mean(x * x, axis=-1, keepdims=True)
        return x * jax.lax.rsqrt(var + RMS_EPS) * g

    doc_n = rms(doc, params["g_doc"])
    qm = qmask.astype(jnp.float32)[..., None]
    que_mean = (que * qm).sum(1) / qm.sum(1)
    que_n = rms(que_mean, params["g_que"])
    q = que_n @ params["wq"].T
    k = doc_n @ params["wk"].T
    qh = q.reshape(bsz, nh, hd)
    kh = k.reshape(bsz, d_len, nh, hd).transpose(0, 2, 1, 3)
    scores = jnp.einsum('bnh,bndh->bnd', qh, kh) / math.sqrt(hd)
    scores = jnp.where(dmask[:, None, :] > 0, scores, NEG_MIN)

    pooling_max_len = math.ceil(d_len / min(wins))
    ph = jnp.zeros((bsz, pooling_max_len, hidden), jnp.float32)
    pm = jnp.zeros((bsz, pooling_max_len), dmask.dtype)
    for index in range(ned):
        cb = bsz // ned
        cw = scores[index::ned]
        cm = dmask[index::ned]
        cv = doc_n[index::ned]
        win = wins[index % len(wins)]
        pad = (-d_len) % win
        if pad:
            cw = jnp.pad(cw, ((0, 0), (0, 0), (pad, 0)))
            cm = jnp.pad(cm, ((0, 0), (pad, 0)))
            cv = jnp.pad(cv, ((0, 0), (pad, 0), (0, 0)))
        L = d_len + pad
        nw = L // win
        sm = jax.nn.softmax(cw.reshape(cb, nh, nw, win), axis=-1)
        swe = jnp.transpose(sm, (0, 2, 3, 1))
        swe = jnp.repeat(swe[..., None], hd, axis=-1).reshape(cb, nw, win, hidden)
        out = (swe * cv.reshape(cb, nw, win, hidden)).sum(2)
        cmp = (cm.reshape(cb, nw, win).sum(-1) > 0).astype(dmask.dtype)
        ph = ph.at[index::ned, pooling_max_len - nw:].set(out)
        pm = pm.at[index::ned, pooling_max_len - nw:].set(cmp)
    return ph, pm


# ----------------------------------- main -----------------------------------
if __name__ == "__main__":
    args = Args()
    hidden = args.compressor_hidden_size
    bsz, d_len, q_len = 4, 16, 8

    key = jax.random.PRNGKey(0)
    k1, k2, k3, k4, k5, k6 = jax.random.split(key, 6)
    que = jax.random.normal(k1, (bsz, q_len, hidden), jnp.float32)
    doc = jax.random.normal(k2, (bsz, d_len, hidden), jnp.float32)
    params = {
        "wq": jax.random.normal(k3, (hidden, hidden), jnp.float32) * 0.05,
        "wk": jax.random.normal(k4, (hidden, hidden), jnp.float32) * 0.05,
        "g_que": 1.0 + 0.1 * jax.random.normal(k5, (hidden,), jnp.float32),
        "g_doc": 1.0 + 0.1 * jax.random.normal(k6, (hidden,), jnp.float32),
    }
    que_lens = jnp.array([8, 6, 7, 5])
    doc_lens = jnp.array([16, 12, 10, 13])
    enc_que_mask = (jnp.arange(q_len)[None, :] < que_lens[:, None]).astype(jnp.float32)
    enc_doc_mask = (jnp.arange(d_len)[None, :] < doc_lens[:, None]).astype(jnp.float32)

    ph, pm = infer_pooling_forward(params, que, doc, enc_doc_mask, enc_que_mask, args)
    ph, pm = jax.block_until_ready((ph, pm))

    rh, rm = reference_forward(params, que, doc, enc_doc_mask, enc_que_mask, args)
    np.testing.assert_allclose(np.asarray(ph), np.asarray(rh), rtol=1e-4, atol=1e-4)
    np.testing.assert_allclose(np.asarray(pm), np.asarray(rm), rtol=0, atol=0)
    print("KERNEL_OK")
</pallas_src>

<mosaic_0001>
module attributes {stable_mosaic.version = 11 : i64} {
  func.func @fused_pooling_kernel(%arg0: i32, %arg1: memref<1x16x32xf32, #tpu.memory_space<vmem>>, %arg2: memref<1x16x1xf32, #tpu.memory_space<vmem>>, %arg3: memref<1x32x32xf32, #tpu.memory_space<vmem>>, %arg4: memref<1x32x1xf32, #tpu.memory_space<vmem>>, %arg5: memref<1x16x32xf32, #tpu.memory_space<vmem>>, %arg6: memref<1x16x1xf32, #tpu.memory_space<vmem>>, %arg7: memref<1x1x1xf32, #tpu.memory_space<vmem>>, %arg8: memref<32x32xf32, #tpu.memory_space<vmem>>, %arg9: memref<32x32xf32, #tpu.memory_space<vmem>>, %arg10: memref<1x32xf32, #tpu.memory_space<vmem>>, %arg11: memref<32x32xf32, #tpu.memory_space<vmem>>, %arg12: memref<2x16xf32, #tpu.memory_space<vmem>>, %arg13: memref<32x2xf32, #tpu.memory_space<vmem>>, %arg14: memref<1x16x32xf32, #tpu.memory_space<vmem>>, %arg15: memref<1x16x1xf32, #tpu.memory_space<vmem>>) attributes {dimension_semantics = [#tpu.dimension_semantics<parallel>], iteration_bounds = array<i64: 2>, scalar_prefetch = 0 : i64, scratch_operands = 0 : i64, tpu.core_type = #tpu.core_type<tc>, window_params = [{transform_indices = @transform_0, window_bounds = array<i64: 1, 16, 32>}, {transform_indices = @transform_1, window_bounds = array<i64: 1, 16, 1>}, {transform_indices = @transform_2, window_bounds = array<i64: 1, 32, 32>}, {transform_indices = @transform_3, window_bounds = array<i64: 1, 32, 1>}, {transform_indices = @transform_4, window_bounds = array<i64: 1, 16, 32>}, {transform_indices = @transform_5, window_bounds = array<i64: 1, 16, 1>}, {transform_indices = @transform_6, window_bounds = array<i64: 1, 1, 1>}, {pipeline_mode = #tpu.pipeline_mode<synchronous>, transform_indices = @transform_7, window_bounds = array<i64: 32, 32>}, {pipeline_mode = #tpu.pipeline_mode<synchronous>, transform_indices = @transform_8, window_bounds = array<i64: 32, 32>}, {pipeline_mode = #tpu.pipeline_mode<synchronous>, transform_indices = @transform_9, window_bounds = array<i64: 1, 32>}, {pipeline_mode = #tpu.pipeline_mode<synchronous>, transform_indices = @transform_10, window_bounds = array<i64: 32, 32>}, {pipeline_mode = #tpu.pipeline_mode<synchronous>, transform_indices = @transform_11, window_bounds = array<i64: 2, 16>}, {pipeline_mode = #tpu.pipeline_mode<synchronous>, transform_indices = @transform_12, window_bounds = array<i64: 32, 2>}, {transform_indices = @transform_13, window_bounds = array<i64: 1, 16, 32>}, {transform_indices = @transform_14, window_bounds = array<i64: 1, 16, 1>}]} {
    %c0 = arith.constant 0 : index
    %c0_0 = arith.constant 0 : index
    %c0_1 = arith.constant 0 : index
    %0 = vector.load %arg1[%c0, %c0_0, %c0_1] : memref<1x16x32xf32, #tpu.memory_space<vmem>>, vector<1x16x32xf32>
    %1 = vector.shape_cast %0 : vector<1x16x32xf32> to vector<16x32xf32>
    %c0_2 = arith.constant 0 : index
    %c0_3 = arith.constant 0 : index
    %c0_4 = arith.constant 0 : index
    %2 = vector.load %arg2[%c0_2, %c0_3, %c0_4] : memref<1x16x1xf32, #tpu.memory_space<vmem>>, vector<1x16x1xf32>
    %3 = vector.shape_cast %2 : vector<1x16x1xf32> to vector<16x1xf32>
    %c0_5 = arith.constant 0 : index
    %c0_6 = arith.constant 0 : index
    %4 = vector.load %arg12[%c0_5, %c0_6] : memref<2x16xf32, #tpu.memory_space<vmem>>, vector<2x16xf32>
    %5 = vector.broadcast %3 : vector<16x1xf32> to vector<16x32xf32>
    %6 = arith.mulf %1, %5 : vector<16x32xf32>
    %cst = arith.constant dense<0.000000e+00> : vector<2x32xf32>
    %7 = tpu.matmul %4, %6, %cst {dimension_numbers = #tpu.dot_dimension_numbers<[1], [0], [0], [1], [0, 0, 1, 1], [], []>} : vector<2x16xf32>, vector<16x32xf32>, vector<2x32xf32> -> vector<2x32xf32>
    %cst_7 = arith.constant dense<0.000000e+00> : vector<2x1xf32>
    %8 = tpu.matmul %4, %3, %cst_7 {dimension_numbers = #tpu.dot_dimension_numbers<[1], [0], [0], [1], [0, 0, 1, 1], [], []>} : vector<2x16xf32>, vector<16x1xf32>, vector<2x1xf32> -> vector<2x1xf32>
    %9 = vector.broadcast %8 : vector<2x1xf32> to vector<2x32xf32>
    %10 = arith.divf %7, %9 : vector<2x32xf32>
    %11 = arith.mulf %10, %10 : vector<2x32xf32>
    %cst_8 = arith.constant dense<0.000000e+00> : vector<2xf32>
    %12 = vector.multi_reduction <add>, %11, %cst_8 [1] : vector<2x32xf32> to vector<2xf32>
    %13 = vector.shape_cast %12 : vector<2xf32> to vector<2x1xf32>
    %cst_9 = arith.constant 3.200000e+01 : f32
    %14 = vector.broadcast %cst_9 : f32 to vector<2x1xf32>
    %15 = arith.divf %13, %14 : vector<2x1xf32>
    %cst_10 = arith.constant 9.99999974E-6 : f32
    %16 = vector.broadcast %cst_10 : f32 to vector<2x1xf32>
    %17 = arith.addf %15, %16 : vector<2x1xf32>
    %18 = math.rsqrt %17 : vector<2x1xf32>
    %19 = vector.broadcast %18 : vector<2x1xf32> to vector<2x32xf32>
    %20 = arith.mulf %10, %19 : vector<2x32xf32>
    %c0_11 = arith.constant 0 : index
    %c0_12 = arith.constant 0 : index
    %21 = vector.load %arg8[%c0_11, %c0_12] : memref<32x32xf32, #tpu.memory_space<vmem>>, vector<32x32xf32>
    %cst_13 = arith.constant dense<0.000000e+00> : vector<2x32xf32>
    %22 = tpu.matmul %20, %21, %cst_13 {dimension_numbers = #tpu.dot_dimension_numbers<[1], [1], [0], [0], [0, 0, 1, 0], [], []>} : vector<2x32xf32>, vector<32x32xf32>, vector<2x32xf32> -> vector<2x32xf32>
    %c0_14 = arith.constant 0 : index
    %c0_15 = arith.constant 0 : index
    %c0_16 = arith.constant 0 : index
    %23 = vector.load %arg3[%c0_14, %c0_15, %c0_16] : memref<1x32x32xf32, #tpu.memory_space<vmem>>, vector<1x32x32xf32>
    %24 = vector.shape_cast %23 : vector<1x32x32xf32> to vector<32x32xf32>
    %25 = arith.mulf %24, %24 : vector<32x32xf32>
    %cst_17 = arith.constant dense<0.000000e+00> : vector<32xf32>
    %26 = vector.multi_reduction <add>, %25, %cst_17 [1] : vector<32x32xf32> to vector<32xf32>
    %27 = vector.shape_cast %26 : vector<32xf32> to vector<32x1xf32>
    %cst_18 = arith.constant 3.200000e+01 : f32
    %28 = vector.broadcast %cst_18 : f32 to vector<32x1xf32>
    %29 = arith.divf %27, %28 : vector<32x1xf32>
    %cst_19 = arith.constant 9.99999974E-6 : f32
    %30 = vector.broadcast %cst_19 : f32 to vector<32x1xf32>
    %31 = arith.addf %29, %30 : vector<32x1xf32>
    %32 = math.rsqrt %31 : vector<32x1xf32>
    %33 = vector.broadcast %32 : vector<32x1xf32> to vector<32x32xf32>
    %34 = arith.mulf %24, %33 : vector<32x32xf32>
    %c0_20 = arith.constant 0 : index
    %c0_21 = arith.constant 0 : index
    %35 = vector.load %arg10[%c0_20, %c0_21] : memref<1x32xf32, #tpu.memory_space<vmem>>, vector<1x32xf32>
    %36 = vector.broadcast %35 : vector<1x32xf32> to vector<32x32xf32>
    %37 = arith.mulf %34, %36 : vector<32x32xf32>
    %c0_22 = arith.constant 0 : index
    %c0_23 = arith.constant 0 : index
    %38 = vector.load %arg9[%c0_22, %c0_23] : memref<32x32xf32, #tpu.memory_space<vmem>>, vector<32x32xf32>
    %cst_24 = arith.constant dense<0.000000e+00> : vector<32x32xf32>
    %39 = tpu.matmul %37, %38, %cst_24 {dimension_numbers = #tpu.dot_dimension_numbers<[1], [1], [0], [0], [0, 0, 1, 0], [], []>} : vector<32x32xf32>, vector<32x32xf32>, vector<32x32xf32> -> vector<32x32xf32>
    %c0_25 = arith.constant 0 : index
    %c0_26 = arith.constant 0 : index
    %40 = vector.load %arg13[%c0_25, %c0_26] : memref<32x2xf32, #tpu.memory_space<vmem>>, vector<32x2xf32>
    %cst_27 = arith.constant dense<0.000000e+00> : vector<32x32xf32>
    %41 = tpu.matmul %40, %22, %cst_27 {dimension_numbers = #tpu.dot_dimension_numbers<[1], [0], [0], [1], [0, 0, 1, 1], [], []>} : vector<32x2xf32>, vector<2x32xf32>, vector<32x32xf32> -> vector<32x32xf32>
    %42 = arith.mulf %41, %39 : vector<32x32xf32>
    %c0_28 = arith.constant 0 : index
    %c0_29 = arith.constant 0 : index
    %43 = vector.load %arg11[%c0_28, %c0_29] : memref<32x32xf32, #tpu.memory_space<vmem>>, vector<32x32xf32>
    %cst_30 = arith.constant dense<0.000000e+00> : vector<32x32xf32>
    %44 = tpu.matmul %42, %43, %cst_30 {dimension_numbers = #tpu.dot_dimension_numbers<[1], [0], [0], [1], [0, 0, 1, 1], [], []>} : vector<32x32xf32>, vector<32x32xf32>, vector<32x32xf32> -> vector<32x32xf32>
    %c0_31 = arith.constant 0 : index
    %c0_32 = arith.constant 0 : index
    %c0_33 = arith.constant 0 : index
    %45 = vector.load %arg4[%c0_31, %c0_32, %c0_33] : memref<1x32x1xf32, #tpu.memory_space<vmem>>, vector<1x32x1xf32>
    %46 = vector.shape_cast %45 : vector<1x32x1xf32> to vector<32x1xf32>
    %cst_34 = arith.constant 0.000000e+00 : f32
    %47 = vector.broadcast %cst_34 : f32 to vector<32x1xf32>
    %48 = arith.cmpf ogt, %46, %47 : vector<32x1xf32>
    %cst_35 = arith.constant -3.40282347E+38 : f32
    %49 = vector.shape_cast %48 : vector<32x1xi1> to vector<32x1xi1>
    %50 = vector.broadcast %49 : vector<32x1xi1> to vector<32x32xi1>
    %51 = vector.broadcast %cst_35 : f32 to vector<32x32xf32>
    %52 = arith.select %50, %44, %51 : vector<32x32xi1>, vector<32x32xf32>
    %cst_36 = arith.constant dense<0xFF800000> : vector<32xf32>
    %53 = vector.multi_reduction <maximumf>, %52, %cst_36 [0] : vector<32x32xf32> to vector<32xf32>
    %54 = vector.shape_cast %53 : vector<32xf32> to vector<1x32xf32>
    %cst_37 = arith.constant 0.000000e+00 : f32
    %55 = vector.broadcast %cst_37 : f32 to vector<1x32xf32>
    %56 = arith.maximumf %54, %55 : vector<1x32xf32>
    %57 = vector.broadcast %56 : vector<1x32xf32> to vector<32x32xf32>
    %58 = arith.subf %52, %57 : vector<32x32xf32>
    %59 = math.exp %58 : vector<32x32xf32>
    %c0_38 = arith.constant 0 : index
    %c0_39 = arith.constant 0 : index
    %c0_40 = arith.constant 0 : index
    %60 = vector.load %arg5[%c0_38, %c0_39, %c0_40] : memref<1x16x32xf32, #tpu.memory_space<vmem>>, vector<1x16x32xf32>
    %61 = vector.shape_cast %60 : vector<1x16x32xf32> to vector<16x32xf32>
    %62 = arith.mulf %59, %37 : vector<32x32xf32>
    %cst_41 = arith.constant dense<0.000000e+00> : vector<16x32xf32>
    %63 = tpu.matmul %61, %62, %cst_41 {dimension_numbers = #tpu.dot_dimension_numbers<[1], [0], [0], [1], [0, 0, 1, 1], [], []>} : vector<16x32xf32>, vector<32x32xf32>, vector<16x32xf32> -> vector<16x32xf32>
    %cst_42 = arith.constant dense<0.000000e+00> : vector<16x32xf32>
    %64 = tpu.matmul %61, %59, %cst_42 {dimension_numbers = #tpu.dot_dimension_numbers<[1], [0], [0], [1], [0, 0, 1, 1], [], []>} : vector<16x32xf32>, vector<32x32xf32>, vector<16x32xf32> -> vector<16x32xf32>
    %c0_43 = arith.constant 0 : index
    %c0_44 = arith.constant 0 : index
    %c0_45 = arith.constant 0 : index
    %65 = vector.load %arg6[%c0_43, %c0_44, %c0_45] : memref<1x16x1xf32, #tpu.memory_space<vmem>>, vector<1x16x1xf32>
    %66 = vector.shape_cast %65 : vector<1x16x1xf32> to vector<16x1xf32>
    %cst_46 = arith.constant 0.000000e+00 : f32
    %67 = vector.broadcast %cst_46 : f32 to vector<1x32xf32>
    %68 = arith.subf %67, %56 : vector<1x32xf32>
    %69 = math.exp %68 : vector<1x32xf32>
    %70 = vector.broadcast %66 : vector<16x1xf32> to vector<16x32xf32>
    %71 = vector.broadcast %69 : vector<1x32xf32> to vector<16x32xf32>
    %72 = arith.mulf %70, %71 : vector<16x32xf32>
    %73 = arith.addf %64, %72 : vector<16x32xf32>
    %cst_47 = arith.constant dense<0.000000e+00> : vector<16x32xf32>
    %74 = tpu.matmul %61, %37, %cst_47 {dimension_numbers = #tpu.dot_dimension_numbers<[1], [0], [0], [1], [0, 0, 1, 1], [], []>} : vector<16x32xf32>, vector<32x32xf32>, vector<16x32xf32> -> vector<16x32xf32>
    %cst_48 = arith.constant 0.000000e+00 : f32
    %75 = vector.broadcast %cst_48 : f32 to vector<16x32xf32>
    %76 = arith.cmpf ole, %73, %75 : vector<16x32xf32>
    %c0_49 = arith.constant 0 : index
    %c0_50 = arith.constant 0 : index
    %c0_51 = arith.constant 0 : index
    %77 = vector.load %arg7[%c0_49, %c0_50, %c0_51] : memref<1x1x1xf32, #tpu.memory_space<vmem>>, vector<1x1x1xf32>
    %78 = vector.shape_cast %77 : vector<1x1x1xf32> to vector<1x1xf32>
    %79 = vector.broadcast %78 : vector<1x1xf32> to vector<16x32xf32>
    %80 = arith.mulf %74, %79 : vector<16x32xf32>
    %cst_52 = arith.constant 1.000000e+00 : f32
    %81 = vector.broadcast %cst_52 : f32 to vector<16x32xf32>
    %82 = arith.select %76, %81, %73 : vector<16x32xi1>, vector<16x32xf32>
    %83 = arith.divf %63, %82 : vector<16x32xf32>
    %84 = arith.select %76, %80, %83 : vector<16x32xi1>, vector<16x32xf32>
    %c0_53 = arith.constant 0 : index
    %c0_54 = arith.constant 0 : index
    %c0_55 = arith.constant 0 : index
    %85 = vector.load %arg14[%c0_53, %c0_54, %c0_55] : memref<1x16x32xf32, #tpu.memory_space<vmem>>, vector<1x16x32xf32>
    %86 = vector.shape_cast %85 : vector<1x16x32xf32> to vector<16x32xf32>
    %87 = vector.shape_cast %84 : vector<16x32xf32> to vector<1x16x32xf32>
    tpu.vector_store %arg14[%c0_53, %c0_54, %c0_55], %87 {strides = array<i32>} : memref<1x16x32xf32, #tpu.memory_space<vmem>>, vector<1x16x32xf32>,
    %cst_56 = arith.constant dense<0.000000e+00> : vector<16x1xf32>
    %88 = tpu.matmul %61, %46, %cst_56 {dimension_numbers = #tpu.dot_dimension_numbers<[1], [0], [0], [1], [0, 0, 1, 1], [], []>} : vector<16x32xf32>, vector<32x1xf32>, vector<16x1xf32> -> vector<16x1xf32>
    %cst_57 = arith.constant 0.000000e+00 : f32
    %89 = vector.broadcast %cst_57 : f32 to vector<16x1xf32>
    %90 = arith.cmpf ogt, %88, %89 : vector<16x1xf32>
    %91 = arith.extui %90 : vector<16x1xi1> to vector<16x1xi32>
    %92 = arith.sitofp %91 : vector<16x1xi32> to vector<16x1xf32>
    %c0_58 = arith.constant 0 : index
    %c0_59 = arith.constant 0 : index
    %c0_60 = arith.constant 0 : index
    %93 = vector.load %arg15[%c0_58, %c0_59, %c0_60] : memref<1x16x1xf32, #tpu.memory_space<vmem>>, vector<1x16x1xf32>
    %94 = vector.shape_cast %93 : vector<1x16x1xf32> to vector<16x1xf32>
    %95 = vector.shape_cast %92 : vector<16x1xf32> to vector<1x16x1xf32>
    tpu.vector_store %arg15[%c0_58, %c0_59, %c0_60], %95 {strides = array<i32>} : memref<1x16x1xf32, #tpu.memory_space<vmem>>, vector<1x16x1xf32>,
    return
  }
  func.func @transform_0(%arg0: i32) -> (i32, i32, i32) {
    %c0_i32 = arith.constant 0 : i32
    %c0_i32_0 = arith.constant 0 : i32
    %c0_i32_1 = arith.constant 0 : i32
    return %arg0, %c0_i32, %c0_i32_0 : i32, i32, i32
  }
  func.func @transform_1(%arg0: i32) -> (i32, i32, i32) {
    %c0_i32 = arith.constant 0 : i32
    %c0_i32_0 = arith.constant 0 : i32
    %c0_i32_1 = arith.constant 0 : i32
    return %arg0, %c0_i32, %c0_i32_0 : i32, i32, i32
  }
  func.func @transform_2(%arg0: i32) -> (i32, i32, i32) {
    %c0_i32 = arith.constant 0 : i32
    %c0_i32_0 = arith.constant 0 : i32
    %c0_i32_1 = arith.constant 0 : i32
    return %arg0, %c0_i32, %c0_i32_0 : i32, i32, i32
  }
  func.func @transform_3(%arg0: i32) -> (i32, i32, i32) {
    %c0_i32 = arith.constant 0 : i32
    %c0_i32_0 = arith.constant 0 : i32
    %c0_i32_1 = arith.constant 0 : i32
    return %arg0, %c0_i32, %c0_i32_0 : i32, i32, i32
  }
  func.func @transform_4(%arg0: i32) -> (i32, i32, i32) {
    %c0_i32 = arith.constant 0 : i32
    %c0_i32_0 = arith.constant 0 : i32
    %c0_i32_1 = arith.constant 0 : i32
    return %arg0, %c0_i32, %c0_i32_0 : i32, i32, i32
  }
  func.func @transform_5(%arg0: i32) -> (i32, i32, i32) {
    %c0_i32 = arith.constant 0 : i32
    %c0_i32_0 = arith.constant 0 : i32
    %c0_i32_1 = arith.constant 0 : i32
    return %arg0, %c0_i32, %c0_i32_0 : i32, i32, i32
  }
  func.func @transform_6(%arg0: i32) -> (i32, i32, i32) {
    %c0_i32 = arith.constant 0 : i32
    %c0_i32_0 = arith.constant 0 : i32
    %c0_i32_1 = arith.constant 0 : i32
    return %arg0, %c0_i32, %c0_i32_0 : i32, i32, i32
  }
  func.func @transform_7(%arg0: i32) -> (i32, i32) {
    %c0_i32 = arith.constant 0 : i32
    %c0_i32_0 = arith.constant 0 : i32
    %c0_i32_1 = arith.constant 0 : i32
    return %c0_i32, %c0_i32_0 : i32, i32
  }
  func.func @transform_8(%arg0: i32) -> (i32, i32) {
    %c0_i32 = arith.constant 0 : i32
    %c0_i32_0 = arith.constant 0 : i32
    %c0_i32_1 = arith.constant 0 : i32
    return %c0_i32, %c0_i32_0 : i32, i32
  }
  func.func @transform_9(%arg0: i32) -> (i32, i32) {
    %c0_i32 = arith.constant 0 : i32
    %c0_i32_0 = arith.constant 0 : i32
    %c0_i32_1 = arith.constant 0 : i32
    return %c0_i32, %c0_i32_0 : i32, i32
  }
  func.func @transform_10(%arg0: i32) -> (i32, i32) {
    %c0_i32 = arith.constant 0 : i32
    %c0_i32_0 = arith.constant 0 : i32
    %c0_i32_1 = arith.constant 0 : i32
    return %c0_i32, %c0_i32_0 : i32, i32
  }
  func.func @transform_11(%arg0: i32) -> (i32, i32) {
    %c0_i32 = arith.constant 0 : i32
    %c0_i32_0 = arith.constant 0 : i32
    %c0_i32_1 = arith.constant 0 : i32
    return %c0_i32, %c0_i32_0 : i32, i32
  }
  func.func @transform_12(%arg0: i32) -> (i32, i32) {
    %c0_i32 = arith.constant 0 : i32
    %c0_i32_0 = arith.constant 0 : i32
    %c0_i32_1 = arith.constant 0 : i32
    return %c0_i32, %c0_i32_0 : i32, i32
  }
  func.func @transform_13(%arg0: i32) -> (i32, i32, i32) {
    %c0_i32 = arith.constant 0 : i32
    %c0_i32_0 = arith.constant 0 : i32
    %c0_i32_1 = arith.constant 0 : i32
    return %arg0, %c0_i32, %c0_i32_0 : i32, i32, i32
  }
  func.func @transform_14(%arg0: i32) -> (i32, i32, i32) {
    %c0_i32 = arith.constant 0 : i32
    %c0_i32_0 = arith.constant 0 : i32
    %c0_i32_1 = arith.constant 0 : i32
    return %arg0, %c0_i32, %c0_i32_0 : i32, i32, i32
  }
}

</mosaic_0001>

<llo_original>
// kernel: tpu_custom_call.1
$region0: #{tpu_custom_call.1}
  #allocation0 [shape = 'u32[]', space=smem, size = 0x4, offset = 0x4, fixed_abs, tag = 'smem constant byte address 0x4 - core index']
  #allocation1 [shape = 'u32[144,128]{1,0:T(1,128)}', space=vmem, size = 0x12000, scoped, tag = 'internal scratch']
  %s0 = inlined_call_operand.vmem [shape: f32[2,16,32], index: 0, kind: input, shape index: {}]
  %s1 = inlined_call_operand.vmem [shape: f32[2,16,1], index: 1, kind: input, shape index: {}]
  %s2 = inlined_call_operand.vmem [shape: f32[2,32,32], index: 2, kind: input, shape index: {}]
  %s3 = inlined_call_operand.vmem [shape: f32[2,32,1], index: 3, kind: input, shape index: {}]
  %s4 = inlined_call_operand.vmem [shape: f32[2,16,32], index: 4, kind: input, shape index: {}]
  %s5 = inlined_call_operand.vmem [shape: f32[2,16,1], index: 5, kind: input, shape index: {}]
  %s6 = inlined_call_operand.vmem [shape: f32[2,1,1], index: 6, kind: input, shape index: {}]
  %s7 = inlined_call_operand.vmem [shape: f32[32,32], index: 7, kind: input, shape index: {}]
  %s8 = inlined_call_operand.vmem [shape: f32[32,32], index: 8, kind: input, shape index: {}]
  %s9 = inlined_call_operand.vmem [shape: f32[1,32], index: 9, kind: input, shape index: {}]
  %s10 = inlined_call_operand.hbm [shape: f32[32,32], index: 10, kind: input, shape index: {}]
  %s11 = inlined_call_operand.vmem [shape: f32[2,16], index: 11, kind: input, shape index: {}]
  %s12 = inlined_call_operand.vmem [shape: f32[32,2], index: 12, kind: input, shape index: {}]
  %s13 = inlined_call_operand.hbm [shape: f32[2,16,32], index: 13, kind: output, shape index: {0}]
  %s14 = inlined_call_operand.vmem [shape: f32[2,16,1], index: 14, kind: output, shape index: {1}]
  %15 = xla_tuple %s13, %s14
  %s16 = sld [smem:[#allocation0]]
  $region97: #{tpu_custom_call.1} parent=0
    _
  %s18 = ssub.s32 1, %s16
  %s19 = scalar_select 0, %s18, %s16
  $region1: #{tpu_custom_call.1} parent=0
    #allocation2 [shape = 'u8[16384]{0}', space=vmem, size = 0x4000, scoped, tag = 'input window, operand 10, single buffered']
    #allocation3 [shape = 's32[2]{0}', space=sflag, size = 0x8, scoped, tag = 'scoped memory for tpu_custom_call.1']
    #allocation4 [shape = 's32[2]{0}', space=sflag, size = 0x8, scoped, tag = 'scoped memory for tpu_custom_call.1']
    #allocation5 [shape = 'u8[16384]{0}', space=vmem, size = 0x4000, scoped, tag = 'output window, operand 0']
    %20 = vsyncpa [#allocation3], 0
    %21 = vsyncpa [#allocation4], 0
    %s22 = scalar_lea.sflag [#allocation4], 1
    %23 = vsyncpa %s22, 0
    loop: start=0, step=1, limit=4
    $region2: #{tpu_custom_call.1} parent=1 // loop_pre_header
      _
    $region3: #{tpu_custom_call.1} parent=1 // loop_header
      %s25 = sphi 0, %s29
      %p26 = scmp.ge.s32.totalorder %s25, 4
      %s35 = sphi 0, %s37
      %s38 = sphi 0, %s35
      %s39 = sphi 0, %s38
      %s55 = sphi 0, %s39
      %s61 = sphi 0, %s63
      %s64 = sphi 0, %s61
      %s65 = sphi 0, %s64
      %s81 = sphi 0, %s65
      %s87 = sphi 0, %s89
      %s90 = sphi 0, %s87
      %s91 = sphi 0, %s90
      %s107 = sphi 0, %s91
      %s113 = sphi 0, %s115
      %s116 = sphi 0, %s113
      %s117 = sphi 0, %s116
      %s133 = sphi 0, %s117
      %s139 = sphi 0, %s141
      %s142 = sphi 0, %s139
      %s143 = sphi 0, %s142
      %s159 = sphi 0, %s143
      %s165 = sphi 0, %s167
      %s168 = sphi 0, %s165
      %s169 = sphi 0, %s168
      %s185 = sphi 0, %s169
      %s191 = sphi 0, %s193
      %s194 = sphi 0, %s191
      %s195 = sphi 0, %s194
      %s211 = sphi 0, %s195
      %s215 = sphi 0, %s215
      %s217 = sphi 0, %s215
      %s218 = sphi 0, %s217
      %s232 = sphi 0, %s218
      %s236 = sphi 0, %s236
      %s238 = sphi 0, %s236
      %s239 = sphi 0, %s238
      %s253 = sphi 0, %s239
      %s257 = sphi 0, %s257
      %s259 = sphi 0, %s257
      %s260 = sphi 0, %s259
      %s274 = sphi 0, %s260
      %s278 = sphi 0, %s278
      %s280 = sphi 0, %s278
      %s281 = sphi 0, %s280
      %s295 = sphi 0, %s281
      %s299 = sphi 0, %s299
      %s301 = sphi 0, %s299
      %s302 = sphi 0, %s301
      %s316 = sphi 0, %s302
      %s320 = sphi 0, %s320
      %s322 = sphi 0, %s320
      %s323 = sphi 0, %s322
      %s337 = sphi 0, %s323
      %s343 = sphi 0, %s345
      %s346 = sphi 0, %s343
      %s347 = sphi 0, %s346
      %s363 = sphi 0, %s347
      %s369 = sphi 0, %s371
      %s372 = sphi 0, %s369
      %s373 = sphi 0, %s372
      %s389 = sphi 0, %s373
    $region4: #{tpu_custom_call.1} parent=1 // loop_header_branch
      %28 = sbr.rel (%p26) target = $region8
    $region5: #{tpu_custom_call.1} parent=1 // loop_body
      %s30 = ssub.s32 %s25, 1
      %s31 = ssub.s32 %s25, 2
      %s32 = sadd.s32 %s25, 1
      %s33 = ssub.s32 %s25, %s32
      %p34 = scmp.eq.s32.totalorder %s33, 0
      %s36 = sadd.s32 %s35, 1
      %s37 = scalar_select %p34, %s35, %s36
      %p40 = pneg %p34
      %p41 = scmp.eq.s32.totalorder %s25, 1
      %p42 = por %p40, %p41
      %p43 = scmp.ne.s32.totalorder %s35, %s38
      %p44 = scmp.eq.s32.totalorder %s25, 0
      %p45 = por %p43, %p44
      %p46 = scmp.ne.s32.totalorder %s35, %s38
      %p47 = scmp.eq.s32.totalorder %s30, 1
      %p48 = por %p46, %p47
      %p49 = scmp.ne.s32.totalorder %s38, %s39
      %p50 = scmp.eq.s32.totalorder %s30, 0
      %p51 = por %p49, %p50
      %p52 = scmp.ne.s32.totalorder %s38, %s39
      %p53 = scmp.eq.s32.totalorder %s31, 1
      %p54 = por %p52, %p53
      %p56 = scmp.ne.s32.totalorder %s39, %s55
      %p57 = scmp.eq.s32.totalorder %s31, 0
      %p58 = por %p56, %p57
      %s59 = ssub.s32 %s25, %s32
      %p60 = scmp.eq.s32.totalorder %s59, 0
      %s62 = sadd.s32 %s61, 1
      %s63 = scalar_select %p60, %s61, %s62
      %p66 = pneg %p60
      %p67 = scmp.eq.s32.totalorder %s25, 1
      %p68 = por %p66, %p67
      %p69 = scmp.ne.s32.totalorder %s61, %s64
      %p70 = scmp.eq.s32.totalorder %s25, 0
      %p71 = por %p69, %p70
      %p72 = scmp.ne.s32.totalorder %s61, %s64
      %p73 = scmp.eq.s32.totalorder %s30, 1
      %p74 = por %p72, %p73
      %p75 = scmp.ne.s32.totalorder %s64, %s65
      %p76 = scmp.eq.s32.totalorder %s30, 0
      %p77 = por %p75, %p76
      %p78 = scmp.ne.s32.totalorder %s64, %s65
      %p79 = scmp.eq.s32.totalorder %s31, 1
      %p80 = por %p78, %p79
      %p82 = scmp.ne.s32.totalorder %s65, %s81
      %p83 = scmp.eq.s32.totalorder %s31, 0
      %p84 = por %p82, %p83
      %s85 = ssub.s32 %s25, %s32
      %p86 = scmp.eq.s32.totalorder %s85, 0
      %s88 = sadd.s32 %s87, 1
      %s89 = scalar_select %p86, %s87, %s88
      %p92 = pneg %p86
      %p93 = scmp.eq.s32.totalorder %s25, 1
      %p94 = por %p92, %p93
      %p95 = scmp.ne.s32.totalorder %s87, %s90
      %p96 = scmp.eq.s32.totalorder %s25, 0
      %p97 = por %p95, %p96
      %p98 = scmp.ne.s32.totalorder %s87, %s90
      %p99 = scmp.eq.s32.totalorder %s30, 1
      %p100 = por %p98, %p99
      %p101 = scmp.ne.s32.totalorder %s90, %s91
      %p102 = scmp.eq.s32.totalorder %s30, 0
      %p103 = por %p101, %p102
      %p104 = scmp.ne.s32.totalorder %s90, %s91
      %p105 = scmp.eq.s32.totalorder %s31, 1
      %p106 = por %p104, %p105
      %p108 = scmp.ne.s32.totalorder %s91, %s107
      %p109 = scmp.eq.s32.totalorder %s31, 0
      %p110 = por %p108, %p109
      %s111 = ssub.s32 %s25, %s32
      %p112 = scmp.eq.s32.totalorder %s111, 0
      %s114 = sadd.s32 %s113, 1
      %s115 = scalar_select %p112, %s113, %s114
      %p118 = pneg %p112
      %p119 = scmp.eq.s32.totalorder %s25, 1
      %p120 = por %p118, %p119
      %p121 = scmp.ne.s32.totalorder %s113, %s116
      %p122 = scmp.eq.s32.totalorder %s25, 0
      %p123 = por %p121, %p122
      %p124 = scmp.ne.s32.totalorder %s113, %s116
      %p125 = scmp.eq.s32.totalorder %s30, 1
      %p126 = por %p124, %p125
      %p127 = scmp.ne.s32.totalorder %s116, %s117
      %p128 = scmp.eq.s32.totalorder %s30, 0
      %p129 = por %p127, %p128
      %p130 = scmp.ne.s32.totalorder %s116, %s117
      %p131 = scmp.eq.s32.totalorder %s31, 1
      %p132 = por %p130, %p131
      %p134 = scmp.ne.s32.totalorder %s117, %s133
      %p135 = scmp.eq.s32.totalorder %s31, 0
      %p136 = por %p134, %p135
      %s137 = ssub.s32 %s25, %s32
      %p138 = scmp.eq.s32.totalorder %s137, 0
      %s140 = sadd.s32 %s139, 1
      %s141 = scalar_select %p138, %s139, %s140
      %p144 = pneg %p138
      %p145 = scmp.eq.s32.totalorder %s25, 1
      %p146 = por %p144, %p145
      %p147 = scmp.ne.s32.totalorder %s139, %s142
      %p148 = scmp.eq.s32.totalorder %s25, 0
      %p149 = por %p147, %p148
      %p150 = scmp.ne.s32.totalorder %s139, %s142
      %p151 = scmp.eq.s32.totalorder %s30, 1
      %p152 = por %p150, %p151
      %p153 = scmp.ne.s32.totalorder %s142, %s143
      %p154 = scmp.eq.s32.totalorder %s30, 0
      %p155 = por %p153, %p154
      %p156 = scmp.ne.s32.totalorder %s142, %s143
      %p157 = scmp.eq.s32.totalorder %s31, 1
      %p158 = por %p156, %p157
      %p160 = scmp.ne.s32.totalorder %s143, %s159
      %p161 = scmp.eq.s32.totalorder %s31, 0
      %p162 = por %p160, %p161
      %s163 = ssub.s32 %s25, %s32
      %p164 = scmp.eq.s32.totalorder %s163, 0
      %s166 = sadd.s32 %s165, 1
      %s167 = scalar_select %p164, %s165, %s166
      %p170 = pneg %p164
      %p171 = scmp.eq.s32.totalorder %s25, 1
      %p172 = por %p170, %p171
      %p173 = scmp.ne.s32.totalorder %s165, %s168
      %p174 = scmp.eq.s32.totalorder %s25, 0
      %p175 = por %p173, %p174
      %p176 = scmp.ne.s32.totalorder %s165, %s168
      %p177 = scmp.eq.s32.totalorder %s30, 1
      %p178 = por %p176, %p177
      %p179 = scmp.ne.s32.totalorder %s168, %s169
      %p180 = scmp.eq.s32.totalorder %s30, 0
      %p181 = por %p179, %p180
      %p182 = scmp.ne.s32.totalorder %s168, %s169
      %p183 = scmp.eq.s32.totalorder %s31, 1
      %p184 = por %p182, %p183
      %p186 = scmp.ne.s32.totalorder %s169, %s185
      %p187 = scmp.eq.s32.totalorder %s31, 0
      %p188 = por %p186, %p187
      %s189 = ssub.s32 %s25, %s32
      %p190 = scmp.eq.s32.totalorder %s189, 0
      %s192 = sadd.s32 %s191, 1
      %s193 = scalar_select %p190, %s191, %s192
      %p196 = pneg %p190
      %p197 = scmp.eq.s32.totalorder %s25, 1
      %p198 = por %p196, %p197
      %p199 = scmp.ne.s32.totalorder %s191, %s194
      %p200 = scmp.eq.s32.totalorder %s25, 0
      %p201 = por %p199, %p200
      %p202 = scmp.ne.s32.totalorder %s191, %s194
      %p203 = scmp.eq.s32.totalorder %s30, 1
      %p204 = por %p202, %p203
      %p205 = scmp.ne.s32.totalorder %s194, %s195
      %p206 = scmp.eq.s32.totalorder %s30, 0
      %p207 = por %p205, %p206
      %p208 = scmp.ne.s32.totalorder %s194, %s195
      %p209 = scmp.eq.s32.totalorder %s31, 1
      %p210 = por %p208, %p209
      %p212 = scmp.ne.s32.totalorder %s195, %s211
      %p213 = scmp.eq.s32.totalorder %s31, 0
      %p214 = por %p212, %p213
      %s216 = sadd.s32 %s215, 1
      %p219 = scmp.eq.s32.totalorder %s25, 1
      %p220 = scmp.ne.s32.totalorder %s215, %s217
      %p221 = scmp.eq.s32.totalorder %s25, 0
      %p222 = por %p220, %p221
      %p223 = scmp.ne.s32.totalorder %s215, %s217
      %p224 = scmp.eq.s32.totalorder %s30, 1
      %p225 = por %p223, %p224
      %p226 = scmp.ne.s32.totalorder %s217, %s218
      %p227 = scmp.eq.s32.totalorder %s30, 0
      %p228 = por %p226, %p227
      %p229 = scmp.ne.s32.totalorder %s217, %s218
      %p230 = scmp.eq.s32.totalorder %s31, 1
      %p231 = por %p229, %p230
      %p233 = scmp.ne.s32.totalorder %s218, %s232
      %p234 = scmp.eq.s32.totalorder %s31, 0
      %p235 = por %p233, %p234
      %s237 = sadd.s32 %s236, 1
      %p240 = scmp.eq.s32.totalorder %s25, 1
      %p241 = scmp.ne.s32.totalorder %s236, %s238
      %p242 = scmp.eq.s32.totalorder %s25, 0
      %p243 = por %p241, %p242
      %p244 = scmp.ne.s32.totalorder %s236, %s238
      %p245 = scmp.eq.s32.totalorder %s30, 1
      %p246 = por %p244, %p245
      %p247 = scmp.ne.s32.totalorder %s238, %s239
      %p248 = scmp.eq.s32.totalorder %s30, 0
      %p249 = por %p247, %p248
      %p250 = scmp.ne.s32.totalorder %s238, %s239
      %p251 = scmp.eq.s32.totalorder %s31, 1
      %p252 = por %p250, %p251
      %p254 = scmp.ne.s32.totalorder %s239, %s253
      %p255 = scmp.eq.s32.totalorder %s31, 0
      %p256 = por %p254, %p255
      %s258 = sadd.s32 %s257, 1
      %p261 = scmp.eq.s32.totalorder %s25, 1
      %p262 = scmp.ne.s32.totalorder %s257, %s259
      %p263 = scmp.eq.s32.totalorder %s25, 0
      %p264 = por %p262, %p263
      %p265 = scmp.ne.s32.totalorder %s257, %s259
      %p266 = scmp.eq.s32.totalorder %s30, 1
      %p267 = por %p265, %p266
      %p268 = scmp.ne.s32.totalorder %s259, %s260
      %p269 = scmp.eq.s32.totalorder %s30, 0
      %p270 = por %p268, %p269
      %p271 = scmp.ne.s32.totalorder %s259, %s260
      %p272 = scmp.eq.s32.totalorder %s31, 1
      %p273 = por %p271, %p272
      %p275 = scmp.ne.s32.totalorder %s260, %s274
      %p276 = scmp.eq.s32.totalorder %s31, 0
      %p277 = por %p275, %p276
      %s279 = sadd.s32 %s278, 1
      %p282 = scmp.eq.s32.totalorder %s25, 1
      %p283 = scmp.ne.s32.totalorder %s278, %s280
      %p284 = scmp.eq.s32.totalorder %s25, 0
      %p285 = por %p283, %p284
      %p286 = scmp.ne.s32.totalorder %s278, %s280
      %p287 = scmp.eq.s32.totalorder %s30, 1
      %p288 = por %p286, %p287
      %p289 = scmp.ne.s32.totalorder %s280, %s281
      %p290 = scmp.eq.s32.totalorder %s30, 0
      %p291 = por %p289, %p290
      %p292 = scmp.ne.s32.totalorder %s280, %s281
      %p293 = scmp.eq.s32.totalorder %s31, 1
      %p294 = por %p292, %p293
      %p296 = scmp.ne.s32.totalorder %s281, %s295
      %p297 = scmp.eq.s32.totalorder %s31, 0
      %p298 = por %p296, %p297
      %s300 = sadd.s32 %s299, 1
      %p303 = scmp.eq.s32.totalorder %s25, 1
      %p304 = scmp.ne.s32.totalorder %s299, %s301
      %p305 = scmp.eq.s32.totalorder %s25, 0
      %p306 = por %p304, %p305
      %p307 = scmp.ne.s32.totalorder %s299, %s301
      %p308 = scmp.eq.s32.totalorder %s30, 1
      %p309 = por %p307, %p308
      %p310 = scmp.ne.s32.totalorder %s301, %s302
      %p311 = scmp.eq.s32.totalorder %s30, 0
      %p312 = por %p310, %p311
      %p313 = scmp.ne.s32.totalorder %s301, %s302
      %p314 = scmp.eq.s32.totalorder %s31, 1
      %p315 = por %p313, %p314
      %p317 = scmp.ne.s32.totalorder %s302, %s316
      %p318 = scmp.eq.s32.totalorder %s31, 0
      %p319 = por %p317, %p318
      %s321 = sadd.s32 %s320, 1
      %p324 = scmp.eq.s32.totalorder %s25, 1
      %p325 = scmp.ne.s32.totalorder %s320, %s322
      %p326 = scmp.eq.s32.totalorder %s25, 0
      %p327 = por %p325, %p326
      %p328 = scmp.ne.s32.totalorder %s320, %s322
      %p329 = scmp.eq.s32.totalorder %s30, 1
      %p330 = por %p328, %p329
      %p331 = scmp.ne.s32.totalorder %s322, %s323
      %p332 = scmp.eq.s32.totalorder %s30, 0
      %p333 = por %p331, %p332
      %p334 = scmp.ne.s32.totalorder %s322, %s323
      %p335 = scmp.eq.s32.totalorder %s31, 1
      %p336 = por %p334, %p335
      %p338 = scmp.ne.s32.totalorder %s323, %s337
      %p339 = scmp.eq.s32.totalorder %s31, 0
      %p340 = por %p338, %p339
      %s341 = ssub.s32 %s25, %s32
      %p342 = scmp.eq.s32.totalorder %s341, 0
      %s344 = sadd.s32 %s343, 1
      %s345 = scalar_select %p342, %s343, %s344
      %p348 = pneg %p342
      %p349 = scmp.eq.s32.totalorder %s25, 1
      %p350 = por %p348, %p349
      %p351 = scmp.ne.s32.totalorder %s343, %s346
      %p352 = scmp.eq.s32.totalorder %s25, 0
      %p353 = por %p351, %p352
      %p354 = scmp.ne.s32.totalorder %s343, %s346
      %p355 = scmp.eq.s32.totalorder %s30, 1
      %p356 = por %p354, %p355
      %p357 = scmp.ne.s32.totalorder %s346, %s347
      %p358 = scmp.eq.s32.totalorder %s30, 0
      %p359 = por %p357, %p358
      %p360 = scmp.ne.s32.totalorder %s346, %s347
      %p361 = scmp.eq.s32.totalorder %s31, 1
      %p362 = por %p360, %p361
      %p364 = scmp.ne.s32.totalorder %s347, %s363
      %p365 = scmp.eq.s32.totalorder %s31, 0
      %p366 = por %p364, %p365
      %s367 = ssub.s32 %s25, %s32
      %p368 = scmp.eq.s32.totalorder %s367, 0
      %s370 = sadd.s32 %s369, 1
      %s371 = scalar_select %p368, %s369, %s370
      %p374 = pneg %p368
      %p375 = scmp.eq.s32.totalorder %s25, 1
      %p376 = por %p374, %p375
      %p377 = scmp.ne.s32.totalorder %s369, %s372
      %p378 = scmp.eq.s32.totalorder %s25, 0
      %p379 = por %p377, %p378
      %p380 = scmp.ne.s32.totalorder %s369, %s372
      %p381 = scmp.eq.s32.totalorder %s30, 1
      %p382 = por %p380, %p381
      %p383 = scmp.ne.s32.totalorder %s372, %s373
      %p384 = scmp.eq.s32.totalorder %s30, 0
      %p385 = por %p383, %p384
      %p386 = scmp.ne.s32.totalorder %s372, %s373
      %p387 = scmp.eq.s32.totalorder %s31, 1
      %p388 = por %p386, %p387
      %p390 = scmp.ne.s32.totalorder %s373, %s389
      %p391 = scmp.eq.s32.totalorder %s31, 0
      %p392 = por %p390, %p391
      %p393 = scmp.le.s32.totalorder 1, %s25
      %p394 = scmp.lt.s32.totalorder %s25, 3
      %p395 = pnand %p393, %p394
      %p396 = pneg %p395
      // Predicated region
      $region9: #{tpu_custom_call.1} parent=5 // pred_check
        _
      $region10: #{tpu_custom_call.1} parent=5 // pred_check_branch
        %398 = sbr.rel (%p395) target = $region12
      $region11: #{tpu_custom_call.1} parent=5 // pred_region
        %s399 = ssub.s32 %s25, 1
        // Predicated region
        $region13: #{tpu_custom_call.1} parent=11 // pred_check
          %p400 = pneg %p228
        $region14: #{tpu_custom_call.1} parent=11 // pred_check_branch
          %402 = sbr.rel (%p400) target = $region16
        $region15: #{tpu_custom_call.1} parent=11 // pred_region
          _
        $region16: #{tpu_custom_call.1} parent=11 // pred_fallthru
          _
        // Predicated region
        $region17: #{tpu_custom_call.1} parent=11 // pred_check
          %p403 = pneg %p249
        $region18: #{tpu_custom_call.1} parent=11 // pred_check_branch
          %405 = sbr.rel (%p403) target = $region20
        $region19: #{tpu_custom_call.1} parent=11 // pred_region
          _
        $region20: #{tpu_custom_call.1} parent=11 // pred_fallthru
          _
        // Predicated region
        $region21: #{tpu_custom_call.1} parent=11 // pred_check
          %p406 = pneg %p270
        $region22: #{tpu_custom_call.1} parent=11 // pred_check_branch
          %408 = sbr.rel (%p406) target = $region24
        $region23: #{tpu_custom_call.1} parent=11 // pred_region
          _
        $region24: #{tpu_custom_call.1} parent=11 // pred_fallthru
          _
        // Predicated region
        $region25: #{tpu_custom_call.1} parent=11 // pred_check
          %p409 = pneg %p291
        $region26: #{tpu_custom_call.1} parent=11 // pred_check_branch
          %411 = sbr.rel (%p409) target = $region28
        $region27: #{tpu_custom_call.1} parent=11 // pred_region
          %s413 = ssub.s32 512, 512
          %414 = vsyncadd [#allocation3], %s413
          %s415 = sshll.u32 [#allocation2], 4
          %s416 = int_to_ptr.vmem [resolvable:$true] %s415
          %421 = dma.hbm_to_vmem [thread:$0]  %s10, 512, %s416, [#allocation3], 128, 128, 8
        $region28: #{tpu_custom_call.1} parent=11 // pred_fallthru
          _
        // Predicated region
        $region29: #{tpu_custom_call.1} parent=11 // pred_check
          %p422 = pneg %p312
        $region30: #{tpu_custom_call.1} parent=11 // pred_check_branch
          %424 = sbr.rel (%p422) target = $region32
        $region31: #{tpu_custom_call.1} parent=11 // pred_region
          _
        $region32: #{tpu_custom_call.1} parent=11 // pred_fallthru
          _
        // Predicated region
        $region33: #{tpu_custom_call.1} parent=11 // pred_check
          %p425 = pneg %p333
        $region34: #{tpu_custom_call.1} parent=11 // pred_check_branch
          %427 = sbr.rel (%p425) target = $region36
        $region35: #{tpu_custom_call.1} parent=11 // pred_region
          _
        $region36: #{tpu_custom_call.1} parent=11 // pred_fallthru
          _
      $region12: #{tpu_custom_call.1} parent=5 // pred_fallthru
        _
      %p428 = scmp.lt.s32.totalorder %s25, 2
      // Predicated region
      $region37: #{tpu_custom_call.1} parent=5 // pred_check
        %p429 = pneg %p428
      $region38: #{tpu_custom_call.1} parent=5 // pred_check_branch
        %431 = sbr.rel (%p429) target = $region40
      $region39: #{tpu_custom_call.1} parent=5 // pred_region
        // Predicated region
        $region41: #{tpu_custom_call.1} parent=39 // pred_check
          %p432 = pneg %p45
        $region42: #{tpu_custom_call.1} parent=39 // pred_check_branch
          %434 = sbr.rel (%p432) target = $region44
        $region43: #{tpu_custom_call.1} parent=39 // pred_region
          %p435 = scmp.lt.s32.totalorder %s25, 1
          %s436 = scalar_select %p435, %s25, 1
          %s437 = smul.addr %s436, 2
          %s438 = smul.addr %s437, 8
          %s439 = scalar_lea.vmem %s0, %s438
        $region44: #{tpu_custom_call.1} parent=39 // pred_fallthru
          _
        // Predicated region
        $region45: #{tpu_custom_call.1} parent=39 // pred_check
          %p440 = pneg %p71
        $region46: #{tpu_custom_call.1} parent=39 // pred_check_branch
          %442 = sbr.rel (%p440) target = $region48
        $region47: #{tpu_custom_call.1} parent=39 // pred_region
          %p443 = scmp.lt.s32.totalorder %s25, 1
          %s444 = scalar_select %p443, %s25, 1
          %s445 = smul.addr %s444, 2
          %s446 = smul.addr %s445, 8
          %s447 = scalar_lea.vmem %s1, %s446
        $region48: #{tpu_custom_call.1} parent=39 // pred_fallthru
          _
        // Predicated region
        $region49: #{tpu_custom_call.1} parent=39 // pred_check
          %p448 = pneg %p97
        $region50: #{tpu_custom_call.1} parent=39 // pred_check_branch
          %450 = sbr.rel (%p448) target = $region52
        $region51: #{tpu_custom_call.1} parent=39 // pred_region
          %p451 = scmp.lt.s32.totalorder %s25, 1
          %s452 = scalar_select %p451, %s25, 1
          %s453 = smul.addr %s452, 4
          %s454 = smul.addr %s453, 8
          %s455 = scalar_lea.vmem %s2, %s454
        $region52: #{tpu_custom_call.1} parent=39 // pred_fallthru
          _
        // Predicated region
        $region53: #{tpu_custom_call.1} parent=39 // pred_check
          %p456 = pneg %p123
        $region54: #{tpu_custom_call.1} parent=39 // pred_check_branch
          %458 = sbr.rel (%p456) target = $region56
        $region55: #{tpu_custom_call.1} parent=39 // pred_region
          %p459 = scmp.lt.s32.totalorder %s25, 1
          %s460 = scalar_select %p459, %s25, 1
          %s461 = smul.addr %s460, 4
          %s462 = smul.addr %s461, 8
          %s463 = scalar_lea.vmem %s3, %s462
        $region56: #{tpu_custom_call.1} parent=39 // pred_fallthru
          _
        // Predicated region
        $region57: #{tpu_custom_call.1} parent=39 // pred_check
          %p464 = pneg %p149
        $region58: #{tpu_custom_call.1} parent=39 // pred_check_branch
          %466 = sbr.rel (%p464) target = $region60
        $region59: #{tpu_custom_call.1} parent=39 // pred_region
          %p467 = scmp.lt.s32.totalorder %s25, 1
          %s468 = scalar_select %p467, %s25, 1
          %s469 = smul.addr %s468, 2
          %s470 = smul.addr %s469, 8
          %s471 = scalar_lea.vmem %s4, %s470
        $region60: #{tpu_custom_call.1} parent=39 // pred_fallthru
          _
        // Predicated region
        $region61: #{tpu_custom_call.1} parent=39 // pred_check
          %p472 = pneg %p175
        $region62: #{tpu_custom_call.1} parent=39 // pred_check_branch
          %474 = sbr.rel (%p472) target = $region64
        $region63: #{tpu_custom_call.1} parent=39 // pred_region
          %p475 = scmp.lt.s32.totalorder %s25, 1
          %s476 = scalar_select %p475, %s25, 1
          %s477 = smul.addr %s476, 2
          %s478 = smul.addr %s477, 8
          %s479 = scalar_lea.vmem %s5, %s478
        $region64: #{tpu_custom_call.1} parent=39 // pred_fallthru
          _
        // Predicated region
        $region65: #{tpu_custom_call.1} parent=39 // pred_check
          %p480 = pneg %p201
        $region66: #{tpu_custom_call.1} parent=39 // pred_check_branch
          %482 = sbr.rel (%p480) target = $region68
        $region67: #{tpu_custom_call.1} parent=39 // pred_region
          %p483 = scmp.lt.s32.totalorder %s25, 1
          %s484 = scalar_select %p483, %s25, 1
          %s485 = scalar_lea.vmem %s6, %s484
        $region68: #{tpu_custom_call.1} parent=39 // pred_fallthru
          _
      $region40: #{tpu_custom_call.1} parent=5 // pred_fallthru
        _
      %p486 = scmp.le.s32.totalorder 1, %s25
      %p487 = scmp.lt.s32.totalorder %s25, 3
      %p488 = pnand %p486, %p487
      %p489 = pneg %p488
      // Predicated region
      $region69: #{tpu_custom_call.1} parent=5 // pred_check
        _
      $region70: #{tpu_custom_call.1} parent=5 // pred_check_branch
        %491 = sbr.rel (%p488) target = $region72
      $region71: #{tpu_custom_call.1} parent=5 // pred_region
        %s492 = ssub.s32 %s25, 1
        // Predicated region
        $region73: #{tpu_custom_call.1} parent=71 // pred_check
          %p493 = pneg %p291
        $region74: #{tpu_custom_call.1} parent=71 // pred_check_branch
          %495 = sbr.rel (%p493) target = $region76
        $region75: #{tpu_custom_call.1} parent=71 // pred_region
          %496 = dma.done [#allocation3], 512
        $region76: #{tpu_custom_call.1} parent=71 // pred_fallthru
          _
        %p497 = scmp.lt.s32.totalorder %s30, 1
        %s498 = scalar_select %p497, %s30, 1
        %s499 = smul.addr %s498, 2
        %s500 = smul.addr %s499, 8
        %s501 = scalar_lea.vmem %s0, %s500
        %p502 = pneg %p51
        %p503 = pneg %p48
        %p504 = scmp.lt.s32.totalorder %s30, 1
        %s505 = scalar_select %p504, %s30, 1
        %s506 = smul.addr %s505, 2
        %s507 = smul.addr %s506, 8
        %s508 = scalar_lea.vmem %s1, %s507
        %p509 = pneg %p77
        %p510 = pneg %p74
        %p511 = scmp.lt.s32.totalorder %s30, 1
        %s512 = scalar_select %p511, %s30, 1
        %s513 = smul.addr %s512, 4
        %s514 = smul.addr %s513, 8
        %s515 = scalar_lea.vmem %s2, %s514
        %p516 = pneg %p103
        %p517 = pneg %p100
        %p518 = scmp.lt.s32.totalorder %s30, 1
        %s519 = scalar_select %p518, %s30, 1
        %s520 = smul.addr %s519, 4
        %s521 = smul.addr %s520, 8
        %s522 = scalar_lea.vmem %s3, %s521
        %p523 = pneg %p129
        %p524 = pneg %p126
        %p525 = scmp.lt.s32.totalorder %s30, 1
        %s526 = scalar_select %p525, %s30, 1
        %s527 = smul.addr %s526, 2
        %s528 = smul.addr %s527, 8
        %s529 = scalar_lea.vmem %s4, %s528
        %p530 = pneg %p155
        %p531 = pneg %p152
        %p532 = scmp.lt.s32.totalorder %s30, 1
        %s533 = scalar_select %p532, %s30, 1
        %s534 = smul.addr %s533, 2
        %s535 = smul.addr %s534, 8
        %s536 = scalar_lea.vmem %s5, %s535
        %p537 = pneg %p181
        %p538 = pneg %p178
        %p539 = scmp.lt.s32.totalorder %s30, 1
        %s540 = scalar_select %p539, %s30, 1
        %s541 = scalar_lea.vmem %s6, %s540
        %p542 = pneg %p207
        %p543 = pneg %p204
        %p544 = pneg %p228
        %p545 = pneg %p225
        %p546 = pneg %p249
        %p547 = pneg %p246
        %p548 = pneg %p270
        %p549 = pneg %p267
        %p550 = pneg %p291
        %p551 = pneg %p288
        %p552 = pneg %p312
        %p553 = pneg %p309
        %p554 = pneg %p333
        %p555 = pneg %p330
        %p556 = pneg %p359
        %p557 = pneg %p356
        %s558 = sand.u32 %s346, 1
        %s559 = scalar_lea.sflag [#allocation4], %s558
        %s560 = sand.u32 %s346, 1
        %s561 = smul.addr %s560, 16
        %s562 = scalar_lea.vmem [#allocation5], %s561
        %p563 = pneg %p385
        %p564 = pneg %p382
        %p565 = scmp.lt.s32.totalorder %s30, 1
        %s566 = scalar_select %p565, %s30, 1
        %s567 = smul.addr %s566, 2
        %s568 = smul.addr %s567, 8
        %s569 = scalar_lea.vmem %s14, %s568
        %p570 = scmp.lt.s32.totalorder %s30, 1
        %s571 = scalar_select %p570, %s30, 1
        %s572 = smul.addr %s571, 2
        %s573 = smul.addr %s572, 8
        %s574 = scalar_lea.vmem %s0, %s573
        %p575 = scmp.lt.s32.totalorder %s30, 1
        %s576 = scalar_select %p575, %s30, 1
        %s577 = smul.addr %s576, 2
        %s578 = smul.addr %s577, 8
        %s579 = scalar_lea.vmem %s1, %s578
        %p580 = scmp.lt.s32.totalorder %s30, 1
        %s581 = scalar_select %p580, %s30, 1
        %s582 = smul.addr %s581, 4
        %s583 = smul.addr %s582, 8
        %s584 = scalar_lea.vmem %s2, %s583
        %p585 = scmp.lt.s32.totalorder %s30, 1
        %s586 = scalar_select %p585, %s30, 1
        %s587 = smul.addr %s586, 4
        %s588 = smul.addr %s587, 8
        %s589 = scalar_lea.vmem %s3, %s588
        %p590 = scmp.lt.s32.totalorder %s30, 1
        %s591 = scalar_select %p590, %s30, 1
        %s592 = smul.addr %s591, 2
        %s593 = smul.addr %s592, 8
        %s594 = scalar_lea.vmem %s4, %s593
        %p595 = scmp.lt.s32.totalorder %s30, 1
        %s596 = scalar_select %p595, %s30, 1
        %s597 = smul.addr %s596, 2
        %s598 = smul.addr %s597, 8
        %s599 = scalar_lea.vmem %s5, %s598
        %p600 = scmp.lt.s32.totalorder %s30, 1
        %s601 = scalar_select %p600, %s30, 1
        %s602 = scalar_lea.vmem %s6, %s601
        %p603 = scmp.lt.s32.totalorder %s30, 1
        %s604 = scalar_select %p603, %s30, 1
        %s605 = smul.addr %s604, 2
        %s606 = smul.addr %s605, 8
        %s607 = scalar_lea.vmem %s14, %s606
        %v608 = vld [vmem:[%s574] sm:$0xff]
        %v609 = vld [vmem:[%s574 + $0x8] sm:$0xff]
        %v610 = vld [vmem:[%s579] sm:$0xff]
        %v611 = vld [vmem:[%s579 + $0x8] sm:$0xff]
        %v612 = vld [vmem:[%s11] sm:$0x3]
        %614 = vset.pattern.permute.xlu0 0
        %615 = vperm.xlu0 %614, %v610
        %v616 = vpop.permute.xlu0 %615
        %619 = vset.pattern.permute.xlu0 0
        %620 = vperm.xlu0 %619, %v611
        %v621 = vpop.permute.xlu0 %620
        %v623 = vmul.f32 %v608, %v616
        %v624 = vmul.f32 %v609, %v621
        %vm625 = vcmask 130048
        %v627 = vsel %vm625, %v612, 0
        %629 = vmatprep.subr.mxu0 0.0
        %630 = vmatpush1.msra.mxu0 %v623
        %631 = vmatprep.subr.mxu0 0.0
        %632 = vmatpush1.msra.mxu0 %v624
        %633 = vmatprep.subr.mxu0 0.0
        %634 = vmatpush1.msra.mxu0 0.0
        %635 = vmatprep.subr.mxu0 0.0
        %636 = vmatpush1.msra.mxu0 0.0
        %637 = vmatprep.subr.mxu0 0.0
        %638 = vmatpush1.msra.mxu0 0.0
        %639 = vmatprep.subr.mxu0 0.0
        %640 = vmatpush1.msra.mxu0 0.0
        %641 = vmatprep.subr.mxu0 0.0
        %642 = vmatpush1.msra.mxu0 0.0
        %643 = vmatprep.subr.mxu0 0.0
        %644 = vmatpush1.msra.mxu0 0.0
        %645 = vmatprep.subr.mxu0 0.0
        %646 = vmatpush1.msra.mxu0 0.0
        %647 = vmatprep.subr.mxu0 0.0
        %648 = vmatpush1.msra.mxu0 0.0
        %649 = vmatprep.subr.mxu0 0.0
        %650 = vmatpush1.msra.mxu0 0.0
        %651 = vmatprep.subr.mxu0 0.0
        %652 = vmatpush1.msra.mxu0 0.0
        %653 = vmatprep.subr.mxu0 0.0
        %654 = vmatpush1.msra.mxu0 0.0
        %655 = vmatprep.subr.mxu0 0.0
        %656 = vmatpush1.msra.mxu0 0.0
        %657 = vmatprep.subr.mxu0 0.0
        %658 = vmatpush1.msra.mxu0 0.0
        %659 = vmatprep.subr.mxu0 0.0
        %660 = vmatpush1.msra.mxu0 0.0
        %661 = vmatprep.subr.mxu0 0.0
        %662 = vmatpush1.msra.mxu0 0.0
        %663 = vmatprep.subr.mxu0 0.0
        %664 = vmatpush1.msra.mxu0 0.0
        %665 = vmatprep.subr.mxu0 0.0
        %666 = vmatpush1.msra.mxu0 0.0
        %667 = vmatprep.subr.mxu0 0.0
        %668 = vmatpush1.msra.mxu0 0.0
        %669 = vmatprep.subr.mxu0 0.0
        %670 = vmatpush1.msra.mxu0 0.0
        %671 = vmatprep.subr.mxu0 0.0
        %672 = vmatpush1.msra.mxu0 0.0
        %673 = vmatprep.subr.mxu0 0.0
        %674 = vmatpush1.msra.mxu0 0.0
        %675 = vmatprep.subr.mxu0 0.0
        %676 = vmatpush1.msra.mxu0 0.0
        %677 = vmatprep.subr.mxu0 0.0
        %678 = vmatpush1.msra.mxu0 0.0
        %679 = vmatprep.subr.mxu0 0.0
        %680 = vmatpush1.msra.mxu0 0.0
        %681 = vmatprep.subr.mxu0 0.0
        %682 = vmatpush1.msra.mxu0 0.0
        %683 = vmatprep.subr.mxu0 0.0
        %684 = vmatpush1.msra.mxu0 0.0
        %685 = vmatprep.subr.mxu0 0.0
        %686 = vmatpush1.msra.mxu0 0.0
        %687 = vmatprep.subr.mxu0 0.0
        %688 = vmatpush1.msra.mxu0 0.0
        %689 = vmatprep.subr.mxu0 0.0
        %690 = vmatpush1.msra.mxu0 0.0
        %691 = vmatprep.subr.mxu0 0.0
        %692 = vmatpush1.msra.mxu0 0.0
        %693 = vmatprep.mubr.f32.mxu0 0.0
        %694 = vmatmul.mubr.f32.gmra.mrb[0].mxu0 %v627
        %v695 = vpop.f32.mrb[0].mxu0
        %v696 = vadd.f32 0.0, %v695
        %v697 = vpop.f32.mrb[0].mxu0
        %698 = vdwg.mxu0
        %699 = vmatprep.subr.mxu0 0.0
        %700 = vmatpush1.msra.mxu0 %v610
        %701 = vmatprep.subr.mxu0 0.0
        %702 = vmatpush1.msra.mxu0 %v611
        %703 = vmatprep.subr.mxu0 0.0
        %704 = vmatpush1.msra.mxu0 0.0
        %705 = vmatprep.subr.mxu0 0.0
        %706 = vmatpush1.msra.mxu0 0.0
        %707 = vmatprep.subr.mxu0 0.0
        %708 = vmatpush1.msra.mxu0 0.0
        %709 = vmatprep.subr.mxu0 0.0
        %710 = vmatpush1.msra.mxu0 0.0
        %711 = vmatprep.subr.mxu0 0.0
        %712 = vmatpush1.msra.mxu0 0.0
        %713 = vmatprep.subr.mxu0 0.0
        %714 = vmatpush1.msra.mxu0 0.0
        %715 = vmatprep.subr.mxu0 0.0
        %716 = vmatpush1.msra.mxu0 0.0
        %717 = vmatprep.subr.mxu0 0.0
        %718 = vmatpush1.msra.mxu0 0.0
        %719 = vmatprep.subr.mxu0 0.0
        %720 = vmatpush1.msra.mxu0 0.0
        %721 = vmatprep.subr.mxu0 0.0
        %722 = vmatpush1.msra.mxu0 0.0
        %723 = vmatprep.subr.mxu0 0.0
        %724 = vmatpush1.msra.mxu0 0.0
        %725 = vmatprep.subr.mxu0 0.0
        %726 = vmatpush1.msra.mxu0 0.0
        %727 = vmatprep.subr.mxu0 0.0
        %728 = vmatpush1.msra.mxu0 0.0
        %729 = vmatprep.subr.mxu0 0.0
        %730 = vmatpush1.msra.mxu0 0.0
        %731 = vmatprep.subr.mxu0 0.0
        %732 = vmatpush1.msra.mxu0 0.0
        %733 = vmatprep.subr.mxu0 0.0
        %734 = vmatpush1.msra.mxu0 0.0
        %735 = vmatprep.subr.mxu0 0.0
        %736 = vmatpush1.msra.mxu0 0.0
        %737 = vmatprep.subr.mxu0 0.0
        %738 = vmatpush1.msra.mxu0 0.0
        %739 = vmatprep.subr.mxu0 0.0
        %740 = vmatpush1.msra.mxu0 0.0
        %741 = vmatprep.subr.mxu0 0.0
        %742 = vmatpush1.msra.mxu0 0.0
        %743 = vmatprep.subr.mxu0 0.0
        %744 = vmatpush1.msra.mxu0 0.0
        %745 = vmatprep.subr.mxu0 0.0
        %746 = vmatpush1.msra.mxu0 0.0
        %747 = vmatprep.subr.mxu0 0.0
        %748 = vmatpush1.msra.mxu0 0.0
        %749 = vmatprep.subr.mxu0 0.0
        %750 = vmatpush1.msra.mxu0 0.0
        %751 = vmatprep.subr.mxu0 0.0
        %752 = vmatpush1.msra.mxu0 0.0
        %753 = vmatprep.subr.mxu0 0.0
        %754 = vmatpush1.msra.mxu0 0.0
        %755 = vmatprep.subr.mxu0 0.0
        %756 = vmatpush1.msra.mxu0 0.0
        %757 = vmatprep.subr.mxu0 0.0
        %758 = vmatpush1.msra.mxu0 0.0
        %759 = vmatprep.subr.mxu0 0.0
        %760 = vmatpush1.msra.mxu0 0.0
        %761 = vmatprep.subr.mxu0 0.0
        %762 = vmatpush1.msra.mxu0 0.0
        %763 = vmatprep.mubr.f32.mxu0 0.0
        %764 = vmatmul.mubr.f32.gmra.mrb[0].mxu0 %v627
        %v765 = vpop.f32.mrb[0].mxu0
        %v766 = vadd.f32 0.0, %v765
        %v767 = vpop.f32.mrb[0].mxu0
        %768 = vdwg.mxu0
        %770 = vset.pattern.permute.xlu0 0
        %771 = vperm.xlu0 %770, %v766
        %v772 = vpop.permute.xlu0 %771
        %v774 = vrcp.pop %v772
        %v775 = vmul.f32 %v696, %v774
        %v776 = vmul.f32 %v775, %v775
        %vm777 = vcmask 254976
        %v778 = vsel %vm777, %v776, 0.0
        %779 = vadd.xlane.f32.xlu0 %v778
        %v780 = vpop.xlane.xlu0 %779
        %v781 = vrcp.pop 32.0
        %v782 = vmul.f32 %v780, %v781
        %v783 = vadd.f32 %v782, 1e-05
        %v784 = vrsqrt.pop %v783
        %v785 = vmul.f32 %v775, %v784
        %v786 = vld [vmem:[%s7] sm:$0xff]
        %v787 = vld [vmem:[%s7 + $0x8] sm:$0xff]
        %v788 = vld [vmem:[%s7 + $0x10] sm:$0xff]
        %v789 = vld [vmem:[%s7 + $0x18] sm:$0xff]
        %vm790 = vcmask 261120
        %v792 = vsel %vm790, %v785, 0
        %v795 = vsel %vm790, %v786, 0
        %v798 = vsel %vm790, %v787, 0
        %v801 = vsel %vm790, %v788, 0
        %v804 = vsel %vm790, %v789, 0
        %806 = vmatprep.subr.mxu0 0.0
        %807 = vmatpush1.xpose.msra.mxu0 %v795
        %808 = vmatprep.subr.mxu0 0.0
        %809 = vmatpush1.xpose.msra.mxu0 %v798
        %810 = vmatprep.subr.mxu0 0.0
        %811 = vmatpush1.xpose.msra.mxu0 %v801
        %812 = vmatprep.subr.mxu0 0.0
        %813 = vmatpush1.xpose.msra.mxu0 %v804
        %814 = vmatprep.subr.mxu0 0.0
        %815 = vmatpush1.xpose.msra.mxu0 0.0
        %816 = vmatprep.subr.mxu0 0.0
        %817 = vmatpush1.xpose.msra.mxu0 0.0
        %818 = vmatprep.subr.mxu0 0.0
        %819 = vmatpush1.xpose.msra.mxu0 0.0
        %820 = vmatprep.subr.mxu0 0.0
        %821 = vmatpush1.xpose.msra.mxu0 0.0
        %822 = vmatprep.subr.mxu0 0.0
        %823 = vmatpush1.xpose.msra.mxu0 0.0
        %824 = vmatprep.subr.mxu0 0.0
        %825 = vmatpush1.xpose.msra.mxu0 0.0
        %826 = vmatprep.subr.mxu0 0.0
        %827 = vmatpush1.xpose.msra.mxu0 0.0
        %828 = vmatprep.subr.mxu0 0.0
        %829 = vmatpush1.xpose.msra.mxu0 0.0
        %830 = vmatprep.subr.mxu0 0.0
        %831 = vmatpush1.xpose.msra.mxu0 0.0
        %832 = vmatprep.subr.mxu0 0.0
        %833 = vmatpush1.xpose.msra.mxu0 0.0
        %834 = vmatprep.subr.mxu0 0.0
        %835 = vmatpush1.xpose.msra.mxu0 0.0
        %836 = vmatprep.subr.mxu0 0.0
        %837 = vmatpush1.xpose.msra.mxu0 0.0
        %838 = vmatprep.subr.mxu0 0.0
        %839 = vmatpush1.xpose.msra.mxu0 0.0
        %840 = vmatprep.subr.mxu0 0.0
        %841 = vmatpush1.xpose.msra.mxu0 0.0
        %842 = vmatprep.subr.mxu0 0.0
        %843 = vmatpush1.xpose.msra.mxu0 0.0
        %844 = vmatprep.subr.mxu0 0.0
        %845 = vmatpush1.xpose.msra.mxu0 0.0
        %846 = vmatprep.subr.mxu0 0.0
        %847 = vmatpush1.xpose.msra.mxu0 0.0
        %848 = vmatprep.subr.mxu0 0.0
        %849 = vmatpush1.xpose.msra.mxu0 0.0
        %850 = vmatprep.subr.mxu0 0.0
        %851 = vmatpush1.xpose.msra.mxu0 0.0
        %852 = vmatprep.subr.mxu0 0.0
        %853 = vmatpush1.xpose.msra.mxu0 0.0
        %854 = vmatprep.subr.mxu0 0.0
        %855 = vmatpush1.xpose.msra.mxu0 0.0
        %856 = vmatprep.subr.mxu0 0.0
        %857 = vmatpush1.xpose.msra.mxu0 0.0
        %858 = vmatprep.subr.mxu0 0.0
        %859 = vmatpush1.xpose.msra.mxu0 0.0
        %860 = vmatprep.subr.mxu0 0.0
        %861 = vmatpush1.xpose.msra.mxu0 0.0
        %862 = vmatprep.subr.mxu0 0.0
        %863 = vmatpush1.xpose.msra.mxu0 0.0
        %864 = vmatprep.subr.mxu0 0.0
        %865 = vmatpush1.xpose.msra.mxu0 0.0
        %866 = vmatprep.subr.mxu0 0.0
        %867 = vmatpush1.xpose.msra.mxu0 0.0
        %868 = vmatprep.subr.mxu0 0.0
        %869 = vmatpush1.xpose.msra.mxu0 0.0
        %870 = vmatprep.mubr.f32.mxu0 0.0
        %871 = vmatmul.mubr.f32.gmra.mrb[0].mxu0 %v792
        %v872 = vpop.f32.mrb[0].mxu0
        %v873 = vadd.f32 0.0, %v872
        %v874 = vpop.f32.mrb[0].mxu0
        %875 = vdwg.mxu0
        %v876 = vld [vmem:[%s584] sm:$0xff]
        %v877 = vld [vmem:[%s584 + $0x8] sm:$0xff]
        %v878 = vld [vmem:[%s584 + $0x10] sm:$0xff]
        %v879 = vld [vmem:[%s584 + $0x18] sm:$0xff]
        %v880 = vmul.f32 %v876, %v876
        %v881 = vmul.f32 %v877, %v877
        %v882 = vmul.f32 %v878, %v878
        %v883 = vmul.f32 %v879, %v879
        %v884 = vsel %vm790, %v880, 0.0
        %885 = vadd.xlane.f32.xlu0 %v884
        %v886 = vpop.xlane.xlu0 %885
        %v887 = vsel %vm790, %v881, 0.0
        %888 = vadd.xlane.f32.xlu0 %v887
        %v889 = vpop.xlane.xlu0 %888
        %v890 = vsel %vm790, %v882, 0.0
        %891 = vadd.xlane.f32.xlu0 %v890
        %v892 = vpop.xlane.xlu0 %891
        %v893 = vsel %vm790, %v883, 0.0
        %894 = vadd.xlane.f32.xlu0 %v893
        %v895 = vpop.xlane.xlu0 %894
        %v896 = vmul.f32 %v886, %v781
        %v897 = vmul.f32 %v889, %v781
        %v898 = vmul.f32 %v892, %v781
        %v899 = vmul.f32 %v895, %v781
        %v900 = vadd.f32 %v896, 1e-05
        %v901 = vadd.f32 %v897, 1e-05
        %v902 = vadd.f32 %v898, 1e-05
        %v903 = vadd.f32 %v899, 1e-05
        %v904 = vrsqrt.pop %v900
        %v905 = vrsqrt.pop %v901
        %v906 = vrsqrt.pop %v902
        %v907 = vrsqrt.pop %v903
        %v908 = vmul.f32 %v876, %v904
        %v909 = vmul.f32 %v877, %v905
        %v910 = vmul.f32 %v878, %v906
        %v911 = vmul.f32 %v879, %v907
        %v912 = vld [vmem:[%s9] sm:$0x1]
        %v914 = vlaneseq
        %v915 = vshrl.u32 %v914, 7
        %v916 = vsub.s32 0, %v915
        %v917 = vrot.slane %v912, %v916
        %v919 = vmul.f32 %v908, %v917
        %v920 = vmul.f32 %v909, %v917
        %v921 = vmul.f32 %v910, %v917
        %v922 = vmul.f32 %v911, %v917
        %v923 = vld [vmem:[%s8] sm:$0xff]
        %v924 = vld [vmem:[%s8 + $0x8] sm:$0xff]
        %v925 = vld [vmem:[%s8 + $0x10] sm:$0xff]
        %v926 = vld [vmem:[%s8 + $0x18] sm:$0xff]
        %v928 = vsel %vm790, %v919, 0
        %v931 = vsel %vm790, %v920, 0
        %v934 = vsel %vm790, %v921, 0
        %v937 = vsel %vm790, %v922, 0
        %v940 = vsel %vm790, %v923, 0
        %v943 = vsel %vm790, %v924, 0
        %v946 = vsel %vm790, %v925, 0
        %v949 = vsel %vm790, %v926, 0
        %951 = vmatprep.subr.mxu0 0.0
        %952 = vmatpush1.xpose.msra.mxu0 %v940
        %953 = vmatprep.subr.mxu0 0.0
        %954 = vmatpush1.xpose.msra.mxu0 %v943
        %955 = vmatprep.subr.mxu0 0.0
        %956 = vmatpush1.xpose.msra.mxu0 %v946
        %957 = vmatprep.subr.mxu0 0.0
        %958 = vmatpush1.xpose.msra.mxu0 %v949
        %959 = vmatprep.subr.mxu0 0.0
        %960 = vmatpush1.xpose.msra.mxu0 0.0
        %961 = vmatprep.subr.mxu0 0.0
        %962 = vmatpush1.xpose.msra.mxu0 0.0
        %963 = vmatprep.subr.mxu0 0.0
        %964 = vmatpush1.xpose.msra.mxu0 0.0
        %965 = vmatprep.subr.mxu0 0.0
        %966 = vmatpush1.xpose.msra.mxu0 0.0
        %967 = vmatprep.subr.mxu0 0.0
        %968 = vmatpush1.xpose.msra.mxu0 0.0
        %969 = vmatprep.subr.mxu0 0.0
        %970 = vmatpush1.xpose.msra.mxu0 0.0
        %971 = vmatprep.subr.mxu0 0.0
        %972 = vmatpush1.xpose.msra.mxu0 0.0
        %973 = vmatprep.subr.mxu0 0.0
        %974 = vmatpush1.xpose.msra.mxu0 0.0
        %975 = vmatprep.subr.mxu0 0.0
        %976 = vmatpush1.xpose.msra.mxu0 0.0
        %977 = vmatprep.subr.mxu0 0.0
        %978 = vmatpush1.xpose.msra.mxu0 0.0
        %979 = vmatprep.subr.mxu0 0.0
        %980 = vmatpush1.xpose.msra.mxu0 0.0
        %981 = vmatprep.subr.mxu0 0.0
        %982 = vmatpush1.xpose.msra.mxu0 0.0
        %983 = vmatprep.subr.mxu0 0.0
        %984 = vmatpush1.xpose.msra.mxu0 0.0
        %985 = vmatprep.subr.mxu0 0.0
        %986 = vmatpush1.xpose.msra.mxu0 0.0
        %987 = vmatprep.subr.mxu0 0.0
        %988 = vmatpush1.xpose.msra.mxu0 0.0
        %989 = vmatprep.subr.mxu0 0.0
        %990 = vmatpush1.xpose.msra.mxu0 0.0
        %991 = vmatprep.subr.mxu0 0.0
        %992 = vmatpush1.xpose.msra.mxu0 0.0
        %993 = vmatprep.subr.mxu0 0.0
        %994 = vmatpush1.xpose.msra.mxu0 0.0
        %995 = vmatprep.subr.mxu0 0.0
        %996 = vmatpush1.xpose.msra.mxu0 0.0
        %997 = vmatprep.subr.mxu0 0.0
        %998 = vmatpush1.xpose.msra.mxu0 0.0
        %999 = vmatprep.subr.mxu0 0.0
        %1000 = vmatpush1.xpose.msra.mxu0 0.0
        %1001 = vmatprep.subr.mxu0 0.0
        %1002 = vmatpush1.xpose.msra.mxu0 0.0
        %1003 = vmatprep.subr.mxu0 0.0
        %1004 = vmatpush1.xpose.msra.mxu0 0.0
        %1005 = vmatprep.subr.mxu0 0.0
        %1006 = vmatpush1.xpose.msra.mxu0 0.0
        %1007 = vmatprep.subr.mxu0 0.0
        %1008 = vmatpush1.xpose.msra.mxu0 0.0
        %1009 = vmatprep.subr.mxu0 0.0
        %1010 = vmatpush1.xpose.msra.mxu0 0.0
        %1011 = vmatprep.subr.mxu0 0.0
        %1012 = vmatpush1.xpose.msra.mxu0 0.0
        %1013 = vmatprep.subr.mxu0 0.0
        %1014 = vmatpush1.xpose.msra.mxu0 0.0
        %1015 = vmatprep.mubr.f32.mxu0 0.0
        %1016 = vmatmul.mubr.f32.gmra.mrb[0].mxu0 %v928
        %v1017 = vpop.f32.mrb[0].mxu0
        %v1018 = vadd.f32 0.0, %v1017
        %v1019 = vpop.f32.mrb[0].mxu0
        %1020 = vmatprep.mubr.f32.mxu0 0.0
        %1021 = vmatmul.mubr.f32.gmra.mrb[0].mxu0 %v931
        %v1022 = vpop.f32.mrb[0].mxu0
        %v1023 = vadd.f32 0.0, %v1022
        %v1024 = vpop.f32.mrb[0].mxu0
        %1025 = vmatprep.mubr.f32.mxu0 0.0
        %1026 = vmatmul.mubr.f32.gmra.mrb[0].mxu0 %v934
        %v1027 = vpop.f32.mrb[0].mxu0
        %v1028 = vadd.f32 0.0, %v1027
        %v1029 = vpop.f32.mrb[0].mxu0
        %1030 = vmatprep.mubr.f32.mxu0 0.0
        %1031 = vmatmul.mubr.f32.gmra.mrb[0].mxu0 %v937
        %v1032 = vpop.f32.mrb[0].mxu0
        %v1033 = vadd.f32 0.0, %v1032
        %v1034 = vpop.f32.mrb[0].mxu0
        %1035 = vdwg.mxu0
        %v1036 = vld [vmem:[%s12] sm:$0xff]
        %v1037 = vld [vmem:[%s12 + $0x8] sm:$0xff]
        %v1038 = vld [vmem:[%s12 + $0x10] sm:$0xff]
        %v1039 = vld [vmem:[%s12 + $0x18] sm:$0xff]
        %vm1040 = vcmask 15360
        %v1042 = vsel %vm1040, %v1036, 0
        %v1045 = vsel %vm1040, %v1037, 0
        %v1048 = vsel %vm1040, %v1038, 0
        %v1051 = vsel %vm1040, %v1039, 0
        %vm1053 = vcmask 1041408
        %v1055 = vsel %vm1053, %v873, 0
        %1057 = vmatprep.subr.mxu0 0.0
        %1058 = vmatpush1.msra.mxu0 %v1055
        %1059 = vmatprep.subr.mxu0 0.0
        %1060 = vmatpush1.msra.mxu0 0.0
        %1061 = vmatprep.subr.mxu0 0.0
        %1062 = vmatpush1.msra.mxu0 0.0
        %1063 = vmatprep.subr.mxu0 0.0
        %1064 = vmatpush1.msra.mxu0 0.0
        %1065 = vmatprep.subr.mxu0 0.0
        %1066 = vmatpush1.msra.mxu0 0.0
        %1067 = vmatprep.subr.mxu0 0.0
        %1068 = vmatpush1.msra.mxu0 0.0
        %1069 = vmatprep.subr.mxu0 0.0
        %1070 = vmatpush1.msra.mxu0 0.0
        %1071 = vmatprep.subr.mxu0 0.0
        %1072 = vmatpush1.msra.mxu0 0.0
        %1073 = vmatprep.subr.mxu0 0.0
        %1074 = vmatpush1.msra.mxu0 0.0
        %1075 = vmatprep.subr.mxu0 0.0
        %1076 = vmatpush1.msra.mxu0 0.0
        %1077 = vmatprep.subr.mxu0 0.0
        %1078 = vmatpush1.msra.mxu0 0.0
        %1079 = vmatprep.subr.mxu0 0.0
        %1080 = vmatpush1.msra.mxu0 0.0
        %1081 = vmatprep.subr.mxu0 0.0
        %1082 = vmatpush1.msra.mxu0 0.0
        %1083 = vmatprep.subr.mxu0 0.0
        %1084 = vmatpush1.msra.mxu0 0.0
        %1085 = vmatprep.subr.mxu0 0.0
        %1086 = vmatpush1.msra.mxu0 0.0
        %1087 = vmatprep.subr.mxu0 0.0
        %1088 = vmatpush1.msra.mxu0 0.0
        %1089 = vmatprep.subr.mxu0 0.0
        %1090 = vmatpush1.msra.mxu0 0.0
        %1091 = vmatprep.subr.mxu0 0.0
        %1092 = vmatpush1.msra.mxu0 0.0
        %1093 = vmatprep.subr.mxu0 0.0
        %1094 = vmatpush1.msra.mxu0 0.0
        %1095 = vmatprep.subr.mxu0 0.0
        %1096 = vmatpush1.msra.mxu0 0.0
        %1097 = vmatprep.subr.mxu0 0.0
        %1098 = vmatpush1.msra.mxu0 0.0
        %1099 = vmatprep.subr.mxu0 0.0
        %1100 = vmatpush1.msra.mxu0 0.0
        %1101 = vmatprep.subr.mxu0 0.0
        %1102 = vmatpush1.msra.mxu0 0.0
        %1103 = vmatprep.subr.mxu0 0.0
        %1104 = vmatpush1.msra.mxu0 0.0
        %1105 = vmatprep.subr.mxu0 0.0
        %1106 = vmatpush1.msra.mxu0 0.0
        %1107 = vmatprep.subr.mxu0 0.0
        %1108 = vmatpush1.msra.mxu0 0.0
        %1109 = vmatprep.subr.mxu0 0.0
        %1110 = vmatpush1.msra.mxu0 0.0
        %1111 = vmatprep.subr.mxu0 0.0
        %1112 = vmatpush1.msra.mxu0 0.0
        %1113 = vmatprep.subr.mxu0 0.0
        %1114 = vmatpush1.msra.mxu0 0.0
        %1115 = vmatprep.subr.mxu0 0.0
        %1116 = vmatpush1.msra.mxu0 0.0
        %1117 = vmatprep.subr.mxu0 0.0
        %1118 = vmatpush1.msra.mxu0 0.0
        %1119 = vmatprep.subr.mxu0 0.0
        %1120 = vmatpush1.msra.mxu0 0.0
        %1121 = vmatprep.mubr.f32.mxu0 0.0
        %1122 = vmatmul.mubr.f32.gmra.mrb[0].mxu0 %v1042
        %v1123 = vpop.f32.mrb[0].mxu0
        %v1124 = vadd.f32 0.0, %v1123
        %v1125 = vpop.f32.mrb[0].mxu0
        %1126 = vmatprep.mubr.f32.mxu0 0.0
        %1127 = vmatmul.mubr.f32.gmra.mrb[0].mxu0 %v1045
        %v1128 = vpop.f32.mrb[0].mxu0
        %v1129 = vadd.f32 0.0, %v1128
        %v1130 = vpop.f32.mrb[0].mxu0
        %1131 = vmatprep.mubr.f32.mxu0 0.0
        %1132 = vmatmul.mubr.f32.gmra.mrb[0].mxu0 %v1048
        %v1133 = vpop.f32.mrb[0].mxu0
        %v1134 = vadd.f32 0.0, %v1133
        %v1135 = vpop.f32.mrb[0].mxu0
        %1136 = vmatprep.mubr.f32.mxu0 0.0
        %1137 = vmatmul.mubr.f32.gmra.mrb[0].mxu0 %v1051
        %v1138 = vpop.f32.mrb[0].mxu0
        %v1139 = vadd.f32 0.0, %v1138
        %v1140 = vpop.f32.mrb[0].mxu0
        %1141 = vdwg.mxu0
        %v1142 = vmul.f32 %v1124, %v1018
        %v1143 = vmul.f32 %v1129, %v1023
        %v1144 = vmul.f32 %v1134, %v1028
        %v1145 = vmul.f32 %v1139, %v1033
        %v1146 = vld [vmem:[#allocation2] sm:$0xff]
        %v1147 = vld [vmem:[#allocation2 + $0x8] sm:$0xff]
        %v1148 = vld [vmem:[#allocation2 + $0x10] sm:$0xff]
        %v1149 = vld [vmem:[#allocation2 + $0x18] sm:$0xff]
        %v1151 = vsel %vm790, %v1142, 0
        %v1154 = vsel %vm790, %v1143, 0
        %v1157 = vsel %vm790, %v1144, 0
        %v1160 = vsel %vm790, %v1145, 0
        %1162 = vmatprep.subr.mxu0 0.0
        %1163 = vmatpush1.msra.mxu0 %v1146
        %1164 = vmatprep.subr.mxu0 0.0
        %1165 = vmatpush1.msra.mxu0 %v1147
        %1166 = vmatprep.subr.mxu0 0.0
        %1167 = vmatpush1.msra.mxu0 %v1148
        %1168 = vmatprep.subr.mxu0 0.0
        %1169 = vmatpush1.msra.mxu0 %v1149
        %1170 = vmatprep.subr.mxu0 0.0
        %1171 = vmatpush1.msra.mxu0 0.0
        %1172 = vmatprep.subr.mxu0 0.0
        %1173 = vmatpush1.msra.mxu0 0.0
        %1174 = vmatprep.subr.mxu0 0.0
        %1175 = vmatpush1.msra.mxu0 0.0
        %1176 = vmatprep.subr.mxu0 0.0
        %1177 = vmatpush1.msra.mxu0 0.0
        %1178 = vmatprep.subr.mxu0 0.0
        %1179 = vmatpush1.msra.mxu0 0.0
        %1180 = vmatprep.subr.mxu0 0.0
        %1181 = vmatpush1.msra.mxu0 0.0
        %1182 = vmatprep.subr.mxu0 0.0
        %1183 = vmatpush1.msra.mxu0 0.0
        %1184 = vmatprep.subr.mxu0 0.0
        %1185 = vmatpush1.msra.mxu0 0.0
        %1186 = vmatprep.subr.mxu0 0.0
        %1187 = vmatpush1.msra.mxu0 0.0
        %1188 = vmatprep.subr.mxu0 0.0
        %1189 = vmatpush1.msra.mxu0 0.0
        %1190 = vmatprep.subr.mxu0 0.0
        %1191 = vmatpush1.msra.mxu0 0.0
        %1192 = vmatprep.subr.mxu0 0.0
        %1193 = vmatpush1.msra.mxu0 0.0
        %1194 = vmatprep.subr.mxu0 0.0
        %1195 = vmatpush1.msra.mxu0 0.0
        %1196 = vmatprep.subr.mxu0 0.0
        %1197 = vmatpush1.msra.mxu0 0.0
        %1198 = vmatprep.subr.mxu0 0.0
        %1199 = vmatpush1.msra.mxu0 0.0
        %1200 = vmatprep.subr.mxu0 0.0
        %1201 = vmatpush1.msra.mxu0 0.0
        %1202 = vmatprep.subr.mxu0 0.0
        %1203 = vmatpush1.msra.mxu0 0.0
        %1204 = vmatprep.subr.mxu0 0.0
        %1205 = vmatpush1.msra.mxu0 0.0
        %1206 = vmatprep.subr.mxu0 0.0
        %1207 = vmatpush1.msra.mxu0 0.0
        %1208 = vmatprep.subr.mxu0 0.0
        %1209 = vmatpush1.msra.mxu0 0.0
        %1210 = vmatprep.subr.mxu0 0.0
        %1211 = vmatpush1.msra.mxu0 0.0
        %1212 = vmatprep.subr.mxu0 0.0
        %1213 = vmatpush1.msra.mxu0 0.0
        %1214 = vmatprep.subr.mxu0 0.0
        %1215 = vmatpush1.msra.mxu0 0.0
        %1216 = vmatprep.subr.mxu0 0.0
        %1217 = vmatpush1.msra.mxu0 0.0
        %1218 = vmatprep.subr.mxu0 0.0
        %1219 = vmatpush1.msra.mxu0 0.0
        %1220 = vmatprep.subr.mxu0 0.0
        %1221 = vmatpush1.msra.mxu0 0.0
        %1222 = vmatprep.subr.mxu0 0.0
        %1223 = vmatpush1.msra.mxu0 0.0
        %1224 = vmatprep.subr.mxu0 0.0
        %1225 = vmatpush1.msra.mxu0 0.0
        %1226 = vmatprep.mubr.f32.mxu0 0.0
        %1227 = vmatmul.mubr.f32.gmra.mrb[0].mxu0 %v1151
        %v1228 = vpop.f32.mrb[0].mxu0
        %v1229 = vadd.f32 0.0, %v1228
        %v1230 = vpop.f32.mrb[0].mxu0
        %1231 = vmatprep.mubr.f32.mxu0 0.0
        %1232 = vmatmul.mubr.f32.gmra.mrb[0].mxu0 %v1154
        %v1233 = vpop.f32.mrb[0].mxu0
        %v1234 = vadd.f32 0.0, %v1233
        %v1235 = vpop.f32.mrb[0].mxu0
        %1236 = vmatprep.mubr.f32.mxu0 0.0
        %1237 = vmatmul.mubr.f32.gmra.mrb[0].mxu0 %v1157
        %v1238 = vpop.f32.mrb[0].mxu0
        %v1239 = vadd.f32 0.0, %v1238
        %v1240 = vpop.f32.mrb[0].mxu0
        %1241 = vmatprep.mubr.f32.mxu0 0.0
        %1242 = vmatmul.mubr.f32.gmra.mrb[0].mxu0 %v1160
        %v1243 = vpop.f32.mrb[0].mxu0
        %v1244 = vadd.f32 0.0, %v1243
        %v1245 = vpop.f32.mrb[0].mxu0
        %1246 = vdwg.mxu0
        %v1247 = vld [vmem:[%s589] sm:$0xff]
        %v1248 = vld [vmem:[%s589 + $0x8] sm:$0xff]
        %v1249 = vld [vmem:[%s589 + $0x10] sm:$0xff]
        %v1250 = vld [vmem:[%s589 + $0x18] sm:$0xff]
        %vm1251 = vcmp.gt.f32.partialorder %v1247, 0.0
        %vm1252 = vcmp.gt.f32.partialorder %v1248, 0.0
        %vm1253 = vcmp.gt.f32.partialorder %v1249, 0.0
        %vm1254 = vcmp.gt.f32.partialorder %v1250, 0.0
        %v1255 = vsel %vm1251, 1, 0
        %v1256 = vsel %vm1252, 1, 0
        %v1257 = vsel %vm1253, 1, 0
        %v1258 = vsel %vm1254, 1, 0
        %1259 = vset.pattern.permute.xlu0 0
        %1260 = vperm.xlu0 %1259, %v1255
        %v1261 = vpop.permute.xlu0 %1260
        %1262 = vset.pattern.permute.xlu0 0
        %1263 = vperm.xlu0 %1262, %v1256
        %v1264 = vpop.permute.xlu0 %1263
        %1265 = vset.pattern.permute.xlu0 0
        %1266 = vperm.xlu0 %1265, %v1257
        %v1267 = vpop.permute.xlu0 %1266
        %1268 = vset.pattern.permute.xlu0 0
        %1269 = vperm.xlu0 %1268, %v1258
        %v1270 = vpop.permute.xlu0 %1269
        %vm1271 = vcmp.eq.s32.totalorder %v1261, 1
        %vm1272 = vcmp.eq.s32.totalorder %v1264, 1
        %vm1273 = vcmp.eq.s32.totalorder %v1267, 1
        %vm1274 = vcmp.eq.s32.totalorder %v1270, 1
        %v1275 = vsel %vm1271, %v1229, -3.4028235e+38
        %v1276 = vsel %vm1272, %v1234, -3.4028235e+38
        %v1277 = vsel %vm1273, %v1239, -3.4028235e+38
        %v1278 = vsel %vm1274, %v1244, -3.4028235e+38
        %v1279 = vsel %vm790, %v1275, -inf
        %v1280 = vsel %vm790, %v1276, -inf
        %v1281 = vsel %vm790, %v1277, -inf
        %v1282 = vsel %vm790, %v1278, -inf
        %v1283 = vmax.f32 %v1279, %v1280
        %v1284 = vmax.f32 %v1281, %v1282
        %v1285 = vmax.f32 %v1283, %v1284
        %v1286 = vrot.slane %v1285, 4
        %v1287 = vmax.f32 %v1285, %v1286
        %v1288 = vrot.slane %v1287, 2
        %v1289 = vmax.f32 %v1287, %v1288
        %v1290 = vrot.slane %v1289, 1
        %v1291 = vmax.f32 %v1289, %v1290
        %v1292 = vmax.f32 %v1291, 0.0
        %v1293 = vsub.f32 %v1275, %v1292
        %v1294 = vsub.f32 %v1276, %v1292
        %v1295 = vsub.f32 %v1277, %v1292
        %v1296 = vsub.f32 %v1278, %v1292
        %v1297 = vmul.f32 %v1293, 1.442695
        %v1298 = vpow.pop %v1297
        %v1299 = vmul.f32 %v1294, 1.442695
        %v1300 = vpow.pop %v1299
        %v1301 = vmul.f32 %v1295, 1.442695
        %v1302 = vpow.pop %v1301
        %v1303 = vmul.f32 %v1296, 1.442695
        %v1304 = vpow.pop %v1303
        %v1305 = vld [vmem:[%s594] sm:$0xff]
        %v1306 = vld [vmem:[%s594 + $0x8] sm:$0xff]
        %v1307 = vmul.f32 %v1298, %v919
        %v1308 = vmul.f32 %v1300, %v920
        %v1309 = vmul.f32 %v1302, %v921
        %v1310 = vmul.f32 %v1304, %v922
        %v1312 = vsel %vm790, %v1305, 0
        %v1315 = vsel %vm790, %v1306, 0
        %1317 = vmatprep.subr.mxu0 0.0
        %1318 = vmatpush1.msra.mxu0 %v1307
        %1319 = vmatprep.subr.mxu0 0.0
        %1320 = vmatpush1.msra.mxu0 %v1308
        %1321 = vmatprep.subr.mxu0 0.0
        %1322 = vmatpush1.msra.mxu0 %v1309
        %1323 = vmatprep.subr.mxu0 0.0
        %1324 = vmatpush1.msra.mxu0 %v1310
        %1325 = vmatprep.subr.mxu0 0.0
        %1326 = vmatpush1.msra.mxu0 0.0
        %1327 = vmatprep.subr.mxu0 0.0
        %1328 = vmatpush1.msra.mxu0 0.0
        %1329 = vmatprep.subr.mxu0 0.0
        %1330 = vmatpush1.msra.mxu0 0.0
        %1331 = vmatprep.subr.mxu0 0.0
        %1332 = vmatpush1.msra.mxu0 0.0
        %1333 = vmatprep.subr.mxu0 0.0
        %1334 = vmatpush1.msra.mxu0 0.0
        %1335 = vmatprep.subr.mxu0 0.0
        %1336 = vmatpush1.msra.mxu0 0.0
        %1337 = vmatprep.subr.mxu0 0.0
        %1338 = vmatpush1.msra.mxu0 0.0
        %1339 = vmatprep.subr.mxu0 0.0
        %1340 = vmatpush1.msra.mxu0 0.0
        %1341 = vmatprep.subr.mxu0 0.0
        %1342 = vmatpush1.msra.mxu0 0.0
        %1343 = vmatprep.subr.mxu0 0.0
        %1344 = vmatpush1.msra.mxu0 0.0
        %1345 = vmatprep.subr.mxu0 0.0
        %1346 = vmatpush1.msra.mxu0 0.0
        %1347 = vmatprep.subr.mxu0 0.0
        %1348 = vmatpush1.msra.mxu0 0.0
        %1349 = vmatprep.subr.mxu0 0.0
        %1350 = vmatpush1.msra.mxu0 0.0
        %1351 = vmatprep.subr.mxu0 0.0
        %1352 = vmatpush1.msra.mxu0 0.0
        %1353 = vmatprep.subr.mxu0 0.0
        %1354 = vmatpush1.msra.mxu0 0.0
        %1355 = vmatprep.subr.mxu0 0.0
        %1356 = vmatpush1.msra.mxu0 0.0
        %1357 = vmatprep.subr.mxu0 0.0
        %1358 = vmatpush1.msra.mxu0 0.0
        %1359 = vmatprep.subr.mxu0 0.0
        %1360 = vmatpush1.msra.mxu0 0.0
        %1361 = vmatprep.subr.mxu0 0.0
        %1362 = vmatpush1.msra.mxu0 0.0
        %1363 = vmatprep.subr.mxu0 0.0
        %1364 = vmatpush1.msra.mxu0 0.0
        %1365 = vmatprep.subr.mxu0 0.0
        %1366 = vmatpush1.msra.mxu0 0.0
        %1367 = vmatprep.subr.mxu0 0.0
        %1368 = vmatpush1.msra.mxu0 0.0
        %1369 = vmatprep.subr.mxu0 0.0
        %1370 = vmatpush1.msra.mxu0 0.0
        %1371 = vmatprep.subr.mxu0 0.0
        %1372 = vmatpush1.msra.mxu0 0.0
        %1373 = vmatprep.subr.mxu0 0.0
        %1374 = vmatpush1.msra.mxu0 0.0
        %1375 = vmatprep.subr.mxu0 0.0
        %1376 = vmatpush1.msra.mxu0 0.0
        %1377 = vmatprep.subr.mxu0 0.0
        %1378 = vmatpush1.msra.mxu0 0.0
        %1379 = vmatprep.subr.mxu0 0.0
        %1380 = vmatpush1.msra.mxu0 0.0
        %1381 = vmatprep.mubr.f32.mxu0 0.0
        %1382 = vmatmul.mubr.f32.gmra.mrb[0].mxu0 %v1312
        %v1383 = vpop.f32.mrb[0].mxu0
        %v1384 = vadd.f32 0.0, %v1383
        %v1385 = vpop.f32.mrb[0].mxu0
        %1386 = vmatprep.mubr.f32.mxu0 0.0
        %1387 = vmatmul.mubr.f32.gmra.mrb[0].mxu0 %v1315
        %v1388 = vpop.f32.mrb[0].mxu0
        %v1389 = vadd.f32 0.0, %v1388
        %v1390 = vpop.f32.mrb[0].mxu0
        %1391 = vdwg.mxu0
        %v1392 = vld [vmem:[%s599] sm:$0xff]
        %v1393 = vld [vmem:[%s599 + $0x8] sm:$0xff]
        %v1394 = vsub.f32 0.0, %v1292
        %v1395 = vmul.f32 %v1394, 1.442695
        %v1396 = vpow.pop %v1395
        %1398 = vset.pattern.permute.xlu0 0
        %1399 = vperm.xlu0 %1398, %v1392
        %v1400 = vpop.permute.xlu0 %1399
        %1403 = vset.pattern.permute.xlu0 0
        %1404 = vperm.xlu0 %1403, %v1393
        %v1405 = vpop.permute.xlu0 %1404
        %v1407 = vmul.f32 %v1400, %v1396
        %v1408 = vmul.f32 %v1405, %v1396
        %1409 = vmatprep.subr.mxu0 0.0
        %1410 = vmatpush1.msra.mxu0 %v1298
        %1411 = vmatprep.subr.mxu0 0.0
        %1412 = vmatpush1.msra.mxu0 %v1300
        %1413 = vmatprep.subr.mxu0 0.0
        %1414 = vmatpush1.msra.mxu0 %v1302
        %1415 = vmatprep.subr.mxu0 0.0
        %1416 = vmatpush1.msra.mxu0 %v1304
        %1417 = vmatprep.subr.mxu0 0.0
        %1418 = vmatpush1.msra.mxu0 0.0
        %1419 = vmatprep.subr.mxu0 0.0
        %1420 = vmatpush1.msra.mxu0 0.0
        %1421 = vmatprep.subr.mxu0 0.0
        %1422 = vmatpush1.msra.mxu0 0.0
        %1423 = vmatprep.subr.mxu0 0.0
        %1424 = vmatpush1.msra.mxu0 0.0
        %1425 = vmatprep.subr.mxu0 0.0
        %1426 = vmatpush1.msra.mxu0 0.0
        %1427 = vmatprep.subr.mxu0 0.0
        %1428 = vmatpush1.msra.mxu0 0.0
        %1429 = vmatprep.subr.mxu0 0.0
        %1430 = vmatpush1.msra.mxu0 0.0
        %1431 = vmatprep.subr.mxu0 0.0
        %1432 = vmatpush1.msra.mxu0 0.0
        %1433 = vmatprep.subr.mxu0 0.0
        %1434 = vmatpush1.msra.mxu0 0.0
        %1435 = vmatprep.subr.mxu0 0.0
        %1436 = vmatpush1.msra.mxu0 0.0
        %1437 = vmatprep.subr.mxu0 0.0
        %1438 = vmatpush1.msra.mxu0 0.0
        %1439 = vmatprep.subr.mxu0 0.0
        %1440 = vmatpush1.msra.mxu0 0.0
        %1441 = vmatprep.subr.mxu0 0.0
        %1442 = vmatpush1.msra.mxu0 0.0
        %1443 = vmatprep.subr.mxu0 0.0
        %1444 = vmatpush1.msra.mxu0 0.0
        %1445 = vmatprep.subr.mxu0 0.0
        %1446 = vmatpush1.msra.mxu0 0.0
        %1447 = vmatprep.subr.mxu0 0.0
        %1448 = vmatpush1.msra.mxu0 0.0
        %1449 = vmatprep.subr.mxu0 0.0
        %1450 = vmatpush1.msra.mxu0 0.0
        %1451 = vmatprep.subr.mxu0 0.0
        %1452 = vmatpush1.msra.mxu0 0.0
        %1453 = vmatprep.subr.mxu0 0.0
        %1454 = vmatpush1.msra.mxu0 0.0
        %1455 = vmatprep.subr.mxu0 0.0
        %1456 = vmatpush1.msra.mxu0 0.0
        %1457 = vmatprep.subr.mxu0 0.0
        %1458 = vmatpush1.msra.mxu0 0.0
        %1459 = vmatprep.subr.mxu0 0.0
        %1460 = vmatpush1.msra.mxu0 0.0
        %1461 = vmatprep.subr.mxu0 0.0
        %1462 = vmatpush1.msra.mxu0 0.0
        %1463 = vmatprep.subr.mxu0 0.0
        %1464 = vmatpush1.msra.mxu0 0.0
        %1465 = vmatprep.subr.mxu0 0.0
        %1466 = vmatpush1.msra.mxu0 0.0
        %1467 = vmatprep.subr.mxu0 0.0
        %1468 = vmatpush1.msra.mxu0 0.0
        %1469 = vmatprep.subr.mxu0 0.0
        %1470 = vmatpush1.msra.mxu0 0.0
        %1471 = vmatprep.subr.mxu0 0.0
        %1472 = vmatpush1.msra.mxu0 0.0
        %1473 = vmatprep.mubr.f32.mxu0 0.0
        %1474 = vmatmul.mubr.f32.gmra.mrb[0].mxu0 %v1312
        %v1475 = vpop.f32.mrb[0].mxu0
        %v1476 = vadd.f32 %v1407, %v1475
        %v1477 = vpop.f32.mrb[0].mxu0
        %1478 = vmatprep.mubr.f32.mxu0 0.0
        %1479 = vmatmul.mubr.f32.gmra.mrb[0].mxu0 %v1315
        %v1480 = vpop.f32.mrb[0].mxu0
        %v1481 = vadd.f32 %v1408, %v1480
        %v1482 = vpop.f32.mrb[0].mxu0
        %1483 = vdwg.mxu0
        %1484 = vmatprep.subr.mxu0 0.0
        %1485 = vmatpush1.msra.mxu0 %v919
        %1486 = vmatprep.subr.mxu0 0.0
        %1487 = vmatpush1.msra.mxu0 %v920
        %1488 = vmatprep.subr.mxu0 0.0
        %1489 = vmatpush1.msra.mxu0 %v921
        %1490 = vmatprep.subr.mxu0 0.0
        %1491 = vmatpush1.msra.mxu0 %v922
        %1492 = vmatprep.subr.mxu0 0.0
        %1493 = vmatpush1.msra.mxu0 0.0
        %1494 = vmatprep.subr.mxu0 0.0
        %1495 = vmatpush1.msra.mxu0 0.0
        %1496 = vmatprep.subr.mxu0 0.0
        %1497 = vmatpush1.msra.mxu0 0.0
        %1498 = vmatprep.subr.mxu0 0.0
        %1499 = vmatpush1.msra.mxu0 0.0
        %1500 = vmatprep.subr.mxu0 0.0
        %1501 = vmatpush1.msra.mxu0 0.0
        %1502 = vmatprep.subr.mxu0 0.0
        %1503 = vmatpush1.msra.mxu0 0.0
        %1504 = vmatprep.subr.mxu0 0.0
        %1505 = vmatpush1.msra.mxu0 0.0
        %1506 = vmatprep.subr.mxu0 0.0
        %1507 = vmatpush1.msra.mxu0 0.0
        %1508 = vmatprep.subr.mxu0 0.0
        %1509 = vmatpush1.msra.mxu0 0.0
        %1510 = vmatprep.subr.mxu0 0.0
        %1511 = vmatpush1.msra.mxu0 0.0
        %1512 = vmatprep.subr.mxu0 0.0
        %1513 = vmatpush1.msra.mxu0 0.0
        %1514 = vmatprep.subr.mxu0 0.0
        %1515 = vmatpush1.msra.mxu0 0.0
        %1516 = vmatprep.subr.mxu0 0.0
        %1517 = vmatpush1.msra.mxu0 0.0
        %1518 = vmatprep.subr.mxu0 0.0
        %1519 = vmatpush1.msra.mxu0 0.0
        %1520 = vmatprep.subr.mxu0 0.0
        %1521 = vmatpush1.msra.mxu0 0.0
        %1522 = vmatprep.subr.mxu0 0.0
        %1523 = vmatpush1.msra.mxu0 0.0
        %1524 = vmatprep.subr.mxu0 0.0
        %1525 = vmatpush1.msra.mxu0 0.0
        %1526 = vmatprep.subr.mxu0 0.0
        %1527 = vmatpush1.msra.mxu0 0.0
        %1528 = vmatprep.subr.mxu0 0.0
        %1529 = vmatpush1.msra.mxu0 0.0
        %1530 = vmatprep.subr.mxu0 0.0
        %1531 = vmatpush1.msra.mxu0 0.0
        %1532 = vmatprep.subr.mxu0 0.0
        %1533 = vmatpush1.msra.mxu0 0.0
        %1534 = vmatprep.subr.mxu0 0.0
        %1535 = vmatpush1.msra.mxu0 0.0
        %1536 = vmatprep.subr.mxu0 0.0
        %1537 = vmatpush1.msra.mxu0 0.0
        %1538 = vmatprep.subr.mxu0 0.0
        %1539 = vmatpush1.msra.mxu0 0.0
        %1540 = vmatprep.subr.mxu0 0.0
        %1541 = vmatpush1.msra.mxu0 0.0
        %1542 = vmatprep.subr.mxu0 0.0
        %1543 = vmatpush1.msra.mxu0 0.0
        %1544 = vmatprep.subr.mxu0 0.0
        %1545 = vmatpush1.msra.mxu0 0.0
        %1546 = vmatprep.subr.mxu0 0.0
        %1547 = vmatpush1.msra.mxu0 0.0
        %1548 = vmatprep.mubr.f32.mxu0 0.0
        %1549 = vmatmul.mubr.f32.gmra.mrb[0].mxu0 %v1312
        %v1550 = vpop.f32.mrb[0].mxu0
        %v1551 = vadd.f32 0.0, %v1550
        %v1552 = vpop.f32.mrb[0].mxu0
        %1553 = vmatprep.mubr.f32.mxu0 0.0
        %1554 = vmatmul.mubr.f32.gmra.mrb[0].mxu0 %v1315
        %v1555 = vpop.f32.mrb[0].mxu0
        %v1556 = vadd.f32 0.0, %v1555
        %v1557 = vpop.f32.mrb[0].mxu0
        %1558 = vdwg.mxu0
        %vm1559 = vcmp.le.f32.partialorder %v1476, 0.0
        %vm1560 = vcmp.le.f32.partialorder %v1481, 0.0
        %v1561 = vld [vmem:[%s602] sm:$0x1]
        %v1563 = vlaneseq
        %v1564 = vshrl.u32 %v1563, 7
        %v1565 = vsub.s32 0, %v1564
        %v1566 = vrot.slane %v1561, %v1565
        %1567 = vset.pattern.permute.xlu0 0
        %1568 = vperm.xlu0 %1567, %v1566
        %v1569 = vpop.permute.xlu0 %1568
        %v1571 = vmul.f32 %v1551, %v1569
        %v1572 = vmul.f32 %v1556, %v1569
        %v1573 = vsel %vm1559, 1.0, %v1476
        %v1574 = vsel %vm1560, 1.0, %v1481
        %v1575 = vrcp.pop %v1573
        %v1576 = vmul.f32 %v1384, %v1575
        %v1577 = vrcp.pop %v1574
        %v1578 = vmul.f32 %v1389, %v1577
        %v1579 = vsel %vm1559, %v1571, %v1576
        %v1580 = vsel %vm1560, %v1572, %v1578
        %1581 = vst.msk [vmem:[%s562] sm:$0xff] %vm790, %v1579
        %1582 = vst.msk [vmem:[%s562 + $0x8] sm:$0xff] %vm790, %v1580
        %1583 = vmatprep.subr.mxu0 0.0
        %1584 = vmatpush1.msra.mxu0 %v1247
        %1585 = vmatprep.subr.mxu0 0.0
        %1586 = vmatpush1.msra.mxu0 %v1248
        %1587 = vmatprep.subr.mxu0 0.0
        %1588 = vmatpush1.msra.mxu0 %v1249
        %1589 = vmatprep.subr.mxu0 0.0
        %1590 = vmatpush1.msra.mxu0 %v1250
        %1591 = vmatprep.subr.mxu0 0.0
        %1592 = vmatpush1.msra.mxu0 0.0
        %1593 = vmatprep.subr.mxu0 0.0
        %1594 = vmatpush1.msra.mxu0 0.0
        %1595 = vmatprep.subr.mxu0 0.0
        %1596 = vmatpush1.msra.mxu0 0.0
        %1597 = vmatprep.subr.mxu0 0.0
        %1598 = vmatpush1.msra.mxu0 0.0
        %1599 = vmatprep.subr.mxu0 0.0
        %1600 = vmatpush1.msra.mxu0 0.0
        %1601 = vmatprep.subr.mxu0 0.0
        %1602 = vmatpush1.msra.mxu0 0.0
        %1603 = vmatprep.subr.mxu0 0.0
        %1604 = vmatpush1.msra.mxu0 0.0
        %1605 = vmatprep.subr.mxu0 0.0
        %1606 = vmatpush1.msra.mxu0 0.0
        %1607 = vmatprep.subr.mxu0 0.0
        %1608 = vmatpush1.msra.mxu0 0.0
        %1609 = vmatprep.subr.mxu0 0.0
        %1610 = vmatpush1.msra.mxu0 0.0
        %1611 = vmatprep.subr.mxu0 0.0
        %1612 = vmatpush1.msra.mxu0 0.0
        %1613 = vmatprep.subr.mxu0 0.0
        %1614 = vmatpush1.msra.mxu0 0.0
        %1615 = vmatprep.subr.mxu0 0.0
        %1616 = vmatpush1.msra.mxu0 0.0
        %1617 = vmatprep.subr.mxu0 0.0
        %1618 = vmatpush1.msra.mxu0 0.0
        %1619 = vmatprep.subr.mxu0 0.0
        %1620 = vmatpush1.msra.mxu0 0.0
        %1621 = vmatprep.subr.mxu0 0.0
        %1622 = vmatpush1.msra.mxu0 0.0
        %1623 = vmatprep.subr.mxu0 0.0
        %1624 = vmatpush1.msra.mxu0 0.0
        %1625 = vmatprep.subr.mxu0 0.0
        %1626 = vmatpush1.msra.mxu0 0.0
        %1627 = vmatprep.subr.mxu0 0.0
        %1628 = vmatpush1.msra.mxu0 0.0
        %1629 = vmatprep.subr.mxu0 0.0
        %1630 = vmatpush1.msra.mxu0 0.0
        %1631 = vmatprep.subr.mxu0 0.0
        %1632 = vmatpush1.msra.mxu0 0.0
        %1633 = vmatprep.subr.mxu0 0.0
        %1634 = vmatpush1.msra.mxu0 0.0
        %1635 = vmatprep.subr.mxu0 0.0
        %1636 = vmatpush1.msra.mxu0 0.0
        %1637 = vmatprep.subr.mxu0 0.0
        %1638 = vmatpush1.msra.mxu0 0.0
        %1639 = vmatprep.subr.mxu0 0.0
        %1640 = vmatpush1.msra.mxu0 0.0
        %1641 = vmatprep.subr.mxu0 0.0
        %1642 = vmatpush1.msra.mxu0 0.0
        %1643 = vmatprep.subr.mxu0 0.0
        %1644 = vmatpush1.msra.mxu0 0.0
        %1645 = vmatprep.subr.mxu0 0.0
        %1646 = vmatpush1.msra.mxu0 0.0
        %1647 = vmatprep.mubr.f32.mxu0 0.0
        %1648 = vmatmul.mubr.f32.gmra.mrb[0].mxu0 %v1312
        %v1649 = vpop.f32.mrb[0].mxu0
        %v1650 = vadd.f32 0.0, %v1649
        %v1651 = vpop.f32.mrb[0].mxu0
        %1652 = vmatprep.mubr.f32.mxu0 0.0
        %1653 = vmatmul.mubr.f32.gmra.mrb[0].mxu0 %v1315
        %v1654 = vpop.f32.mrb[0].mxu0
        %v1655 = vadd.f32 0.0, %v1654
        %v1656 = vpop.f32.mrb[0].mxu0
        %1657 = vdwg.mxu0
        %vm1658 = vcmp.gt.f32.partialorder %v1650, 0.0
        %vm1659 = vcmp.gt.f32.partialorder %v1655, 0.0
        %v1660 = vsel %vm1658, 1, 0
        %v1661 = vsel %vm1659, 1, 0
        %v1662 = vcvt.s32.f32 %v1660
        %v1663 = vcvt.s32.f32 %v1661
        %vm1664 = vcmask 7168
        %1665 = vst.msk [vmem:[%s607] sm:$0xff] %vm1664, %v1662
        %1666 = vst.msk [vmem:[%s607 + $0x8] sm:$0xff] %vm1664, %v1663
        %s1667 = sand.u32 %s346, 1
        %s1668 = scalar_lea.sflag [#allocation4], %s1667
        %s1669 = sand.u32 %s346, 1
        %s1670 = smul.addr %s1669, 16
        %s1671 = scalar_lea.vmem [#allocation5], %s1670
        %p1672 = scmp.lt.s32.totalorder %s30, 1
        %s1673 = scalar_select %p1672, %s30, 1
        %s1674 = smul.addr %s1673, 2
        %s1675 = smul.addr %s1674, 8
        %s1676 = scalar_lea.vmem %s14, %s1675
        // Predicated region
        $region77: #{tpu_custom_call.1} parent=71 // pred_check
          %p1677 = pneg %p356
        $region78: #{tpu_custom_call.1} parent=71 // pred_check_branch
          %1679 = sbr.rel (%p1677) target = $region80
        $region79: #{tpu_custom_call.1} parent=71 // pred_region
          %s1681 = ssub.s32 256, 256
          %1682 = vsyncadd %s1668, %s1681
          %s1683 = smul.addr %s30, 2
          %s1684 = smul.addr %s1683, 128
          %s1685 = scalar_lea.hbm %s13, %s1684
          %s1686 = sshll.u32 %s1671, 4
          %s1687 = int_to_ptr.vmem [resolvable:$true] %s1686
          %1692 = dma.vmem_to_hbm [thread:$0]  %s1687, 256, %s1685, %s1668, 128, 128, 8
        $region80: #{tpu_custom_call.1} parent=71 // pred_fallthru
          _
        // Predicated region
        $region81: #{tpu_custom_call.1} parent=71 // pred_check
          %p1693 = pneg %p382
        $region82: #{tpu_custom_call.1} parent=71 // pred_check_branch
          %1695 = sbr.rel (%p1693) target = $region84
        $region83: #{tpu_custom_call.1} parent=71 // pred_region
          _
        $region84: #{tpu_custom_call.1} parent=71 // pred_fallthru
          _
      $region72: #{tpu_custom_call.1} parent=5 // pred_fallthru
        _
      %p1696 = scmp.le.s32.totalorder 2, %s25
      // Predicated region
      $region85: #{tpu_custom_call.1} parent=5 // pred_check
        %p1697 = pneg %p1696
      $region86: #{tpu_custom_call.1} parent=5 // pred_check_branch
        %1699 = sbr.rel (%p1697) target = $region88
      $region87: #{tpu_custom_call.1} parent=5 // pred_region
        %s1700 = ssub.s32 %s25, 2
        // Predicated region
        $region89: #{tpu_custom_call.1} parent=87 // pred_check
          %p1701 = pneg %p362
        $region90: #{tpu_custom_call.1} parent=87 // pred_check_branch
          %1703 = sbr.rel (%p1701) target = $region92
        $region91: #{tpu_custom_call.1} parent=87 // pred_region
          %s1704 = sand.u32 %s347, 1
          %s1705 = scalar_lea.sflag [#allocation4], %s1704
          %s1706 = sand.u32 %s347, 1
          %s1707 = smul.addr %s1706, 16
          %s1708 = scalar_lea.vmem [#allocation5], %s1707
          %1709 = dma.done %s1705, 256
        $region92: #{tpu_custom_call.1} parent=87 // pred_fallthru
          _
        // Predicated region
        $region93: #{tpu_custom_call.1} parent=87 // pred_check
          %p1710 = pneg %p388
        $region94: #{tpu_custom_call.1} parent=87 // pred_check_branch
          %1712 = sbr.rel (%p1710) target = $region96
        $region95: #{tpu_custom_call.1} parent=87 // pred_region
          %p1713 = scmp.lt.s32.totalorder %s31, 1
          %s1714 = scalar_select %p1713, %s31, 1
          %s1715 = smul.addr %s1714, 2
          %s1716 = smul.addr %s1715, 8
          %s1717 = scalar_lea.vmem %s14, %s1716
        $region96: #{tpu_custom_call.1} parent=87 // pred_fallthru
          _
      $region88: #{tpu_custom_call.1} parent=5 // pred_fallthru
        _
    $region6: #{tpu_custom_call.1} parent=1 // loop_footer
      %s29 = sadd.s32 1, %s25
    $region7: #{tpu_custom_call.1} parent=1 // loop_footer_branch
      %24 = sbr.rel target = $region3
    $region8: #{tpu_custom_call.1} parent=1 // loop_exit
      _
    %1718 = vsyncpa [#allocation3], 1
    %s1719 = scalar_lea.sflag [#allocation3], 1
    %1720 = vsyncpa %s1719, 1
    %1721 = vsyncpa [#allocation4], 1
    %s1722 = scalar_lea.sflag [#allocation4], 1
    %1723 = vsyncpa %s1722, 1

</llo_original>
